<compile_context>
chip_gen: v5e
topology: v5e:2x2
jax: 0.10.0
libtpu: 0.0.40
codegen_flags: <defaults>
</compile_context>

<pallas_src>
import functools
import math

import jax
import jax.numpy as jnp
from jax.experimental import pallas as pl
from jax.experimental.pallas import tpu as pltpu

# ----------------------------- model hyperparams (small) --------------------
IMG = 16          # image_size (small stand-in for 224)
PATCH = 4         # patch_size
C_IN = 3          # RGB
SEG_CLASSES = 4   # swin_cofig.seg_classes
EMBED = 32        # vision_width stand-in (768 for vit='base')
HEADS = 4
DH = EMBED // HEADS
MLP_HID = 128
SEQ = 8           # token sequence length (tokens / segment_ids / input_mask)
NUM_PATCHES = (IMG // PATCH) ** 2
S_TOK = NUM_PATCHES + 1
PATCH_DIM = C_IN * PATCH * PATCH


# ======================= fused segmentation + argmax kernel ==================
def _seg_argmax_kernel(x_ref, w_ref, b_ref, o_ref):
    # x_ref: [1, C_IN, H*W]  (pixels lane-dense)   -- VMEM
    # w_ref: [C_IN, SEG_CLASSES], b_ref: [SEG_CLASSES]  -- SMEM scalar tables
    # o_ref: [1, 1, H*W] int32                      -- lane-dense output
    hw = x_ref.shape[2]
    x = x_ref[0]                                      # [C_IN, HW]
    xs = [x[k:k + 1, :] for k in range(C_IN)]         # C_IN rows of [1, HW]

    best_val = None
    best_idx = None
    for c in range(SEG_CLASSES):
        # 1x1-conv logits via VPU broadcast mul-adds (MXU would be 97% zeros)
        logit = xs[0] * w_ref[0, c] + b_ref[c]
        for k in range(1, C_IN):
            logit = logit + xs[k] * w_ref[k, c]
        if c == 0:
            best_val = logit
            best_idx = jnp.zeros((1, hw), jnp.int32)
        else:
            better = logit > best_val                 # strict ">" -> first max wins ties
            best_val = jnp.where(better, logit, best_val)
            best_idx = jnp.where(better, jnp.int32(c), best_idx)
    o_ref[0] = best_idx


def segmen_argmax(img_nchw, params):
    """torch: argmax(softmax(segmen(img), dim=1), dim=1).squeeze(0).

    softmax is monotonic so it is dropped; argmax runs on the raw logits.
    """
    N, C, H, W = img_nchw.shape
    x = img_nchw.reshape(N, C, H * W)                 # channels on sublanes, pixels on lanes
    out = pl.pallas_call(
        _seg_argmax_kernel,
        out_shape=jax.ShapeDtypeStruct((N, 1, H * W), jnp.int32),
        grid=(N,),
        in_specs=[
            pl.BlockSpec((1, C, H * W), lambda i: (i, 0, 0)),
            pl.BlockSpec(memory_space=pltpu.MemorySpace.SMEM),
            pl.BlockSpec(memory_space=pltpu.MemorySpace.SMEM),
        ],
        out_specs=pl.BlockSpec((1, 1, H * W), lambda i: (i, 0, 0)),
        compiler_params=pltpu.CompilerParams(
            dimension_semantics=("parallel",)),
    )(x, params["seg_w"], params["seg_b"])
    out = out.reshape(N, H, W)
    if N == 1:                                        # torch .squeeze(0)
        out = out[0]
    return out


# ======================= fused ViT encoder block kernel =======================
def _erf(x):
    # Abramowitz & Stegun 7.1.26 (|err| < 1.5e-7): exact-erf GELU without
    # relying on a lax.erf lowering inside Mosaic.
    a1, a2, a3, a4, a5 = (0.254829592, -0.284496736, 1.421413741,
                          -1.453152027, 1.061405429)
    p = 0.3275911
    s = jnp.where(x >= 0.0, 1.0, -1.0)
    ax = jnp.abs(x)
    t = 1.0 / (1.0 + p * ax)
    poly = ((((a5 * t + a4) * t + a3) * t + a2) * t + a1) * t
    return s * (1.0 - poly * jnp.exp(-ax * ax))


def _gelu_exact(x):
    return 0.5 * x * (1.0 + _erf(x * 0.7071067811865476))


def _layernorm(x, g, b, eps=1e-6):
    mu = jnp.mean(x, axis=-1, keepdims=True)
    var = jnp.mean((x - mu) ** 2, axis=-1, keepdims=True)
    return (x - mu) * jax.lax.rsqrt(var + eps) * g + b


def _vit_block_kernel(patches_ref, cls_ref, pos_ref,
                      pw_ref, pb_ref,
                      ln1g_ref, ln1b_ref,
                      qkvw_ref, qkvb_ref,
                      projw_ref, projb_ref,
                      ln2g_ref, ln2b_ref,
                      fc1w_ref, fc1b_ref,
                      fc2w_ref, fc2b_ref,
                      lnfg_ref, lnfb_ref,
                      o_ref):
    """One batch element per grid step; all weights & activations stay in VMEM."""
    f32 = jnp.float32

    # --- patch embedding + cls token + positional embedding ---
    emb = jnp.dot(patches_ref[0], pw_ref[...],
                  preferred_element_type=f32) + pb_ref[...]          # [P, E]
    # stage [cls; emb] directly in the output block (VMEM) to avoid a concat
    o_ref[0, 0:1, :] = cls_ref[...]
    o_ref[0, 1:, :] = emb
    x = o_ref[0] + pos_ref[...]                                      # [S, E]

    # --- attention (all heads in this one grid step) ---
    h = _layernorm(x, ln1g_ref[...], ln1b_ref[...])
    qkv = jnp.dot(h, qkvw_ref[...],
                  preferred_element_type=f32) + qkvb_ref[...]        # [S, 3E]
    scale = 1.0 / math.sqrt(DH)
    attn = None
    for hd in range(HEADS):
        q = qkv[:, hd * DH:(hd + 1) * DH]                            # [S, DH]
        k = qkv[:, EMBED + hd * DH:EMBED + (hd + 1) * DH]
        v = qkv[:, 2 * EMBED + hd * DH:2 * EMBED + (hd + 1) * DH]
        # q @ k^T without an explicit transpose
        s = jax.lax.dot_general(q, k, (((1,), (1,)), ((), ())),
                                preferred_element_type=f32) * scale  # [S, S]
        m = jnp.max(s, axis=-1, keepdims=True)
        p = jnp.exp(s - m)
        p = p * pl.reciprocal(jnp.sum(p, axis=-1, keepdims=True), approx=True)
        oh = jnp.dot(p, v, preferred_element_type=f32)               # [S, DH]
        # fold this head's slice of the output projection in here (no lane concat)
        contrib = jnp.dot(oh, projw_ref[hd * DH:(hd + 1) * DH, :],
                          preferred_element_type=f32)                # [S, E]
        attn = contrib if attn is None else attn + contrib
    x = x + attn + projb_ref[...]

    # --- MLP ---
    h = _layernorm(x, ln2g_ref[...], ln2b_ref[...])
    hmid = jnp.dot(h, fc1w_ref[...],
                   preferred_element_type=f32) + fc1b_ref[...]       # [S, HID]
    hmid = _gelu_exact(hmid)
    x = x + jnp.dot(hmid, fc2w_ref[...],
                    preferred_element_type=f32) + fc2b_ref[...]

    o_ref[0] = _layernorm(x, lnfg_ref[...], lnfb_ref[...])


def extract_patches(image_nchw, patch):
    # NCHW -> [N, num_patches, C*patch*patch]  (flatten order C, ph, pw = Conv2d)
    N, C, H, W = image_nchw.shape
    gh, gw = H // patch, W // patch
    x = image_nchw.reshape(N, C, gh, patch, gw, patch)
    x = x.transpose(0, 2, 4, 1, 3, 5)                 # N, gh, gw, C, ph, pw
    return x.reshape(N, gh * gw, C * patch * patch)


def vit_encoder(image_nchw, params):
    N = image_nchw.shape[0]
    patches = extract_patches(image_nchw, PATCH)      # [N, P, PATCH_DIM] (layout plumbing)

    def full(shape):
        return pl.BlockSpec(shape, lambda b, _s=len(shape): (0,) * _s)

    in_specs = [
        pl.BlockSpec((1, NUM_PATCHES, PATCH_DIM), lambda b: (b, 0, 0)),
        full((1, EMBED)),                              # cls
        full((S_TOK, EMBED)),                          # pos
        full((PATCH_DIM, EMBED)), full((1, EMBED)),    # patch embed w, b
        full((1, EMBED)), full((1, EMBED)),            # ln1 g, b
        full((EMBED, 3 * EMBED)), full((1, 3 * EMBED)),  # qkv w, b
        full((EMBED, EMBED)), full((1, EMBED)),        # proj w, b
        full((1, EMBED)), full((1, EMBED)),            # ln2 g, b
        full((EMBED, MLP_HID)), full((1, MLP_HID)),    # fc1 w, b
        full((MLP_HID, EMBED)), full((1, EMBED)),      # fc2 w, b
        full((1, EMBED)), full((1, EMBED)),            # lnf g, b
    ]
    return pl.pallas_call(
        _vit_block_kernel,
        out_shape=jax.ShapeDtypeStruct((N, S_TOK, EMBED), jnp.float32),
        grid=(N,),
        in_specs=in_specs,
        out_specs=pl.BlockSpec((1, S_TOK, EMBED), lambda b: (b, 0, 0)),
        compiler_params=pltpu.CompilerParams(
            dimension_semantics=("parallel",)),
    )(patches, params["cls"], params["pos"],
      params["patch_w"], params["patch_b"],
      params["ln1_g"], params["ln1_b"],
      params["qkv_w"], params["qkv_b"],
      params["proj_w"], params["proj_b"],
      params["ln2_g"], params["ln2_b"],
      params["fc1_w"], params["fc1_b"],
      params["fc2_w"], params["fc2_b"],
      params["lnf_g"], params["lnf_b"])


# ----------------------------- forward ----------------------------------------
@jax.jit
def _forward_jit(img, image, params):
    seg_map = segmen_argmax(img, params)
    v_feat1 = vit_encoder(image, params)
    return seg_map, v_feat1


def vqa10_forward(img, image, tokens, segment_ids, input_mask, params):
    # tokens / segment_ids / input_mask are unused in forward, as in the torch module
    seg_map, v_feat1 = _forward_jit(img, image, params)
    return (1, 2), seg_map, v_feat1


# ----------------------------- params ----------------------------------------
def init_params(key):
    ks = jax.random.split(key, 8)
    n = lambda k, shape, s=0.02: (s * jax.random.normal(k, shape)).astype(jnp.float32)
    return {
        # segmentation head (1x1 conv stand-in)
        "seg_w": n(ks[0], (C_IN, SEG_CLASSES)),
        "seg_b": jnp.zeros((SEG_CLASSES,), jnp.float32),
        # ViT patch embed
        "patch_w": n(ks[1], (PATCH_DIM, EMBED)),
        "patch_b": jnp.zeros((1, EMBED), jnp.float32),
        "cls": n(ks[2], (1, EMBED)),
        "pos": n(ks[3], (S_TOK, EMBED)),
        # transformer block
        "ln1_g": jnp.ones((1, EMBED), jnp.float32),
        "ln1_b": jnp.zeros((1, EMBED), jnp.float32),
        "qkv_w": n(ks[4], (EMBED, 3 * EMBED)),
        "qkv_b": jnp.zeros((1, 3 * EMBED), jnp.float32),
        "proj_w": n(ks[5], (EMBED, EMBED)),
        "proj_b": jnp.zeros((1, EMBED), jnp.float32),
        "ln2_g": jnp.ones((1, EMBED), jnp.float32),
        "ln2_b": jnp.zeros((1, EMBED), jnp.float32),
        "fc1_w": n(ks[6], (EMBED, MLP_HID)),
        "fc1_b": jnp.zeros((1, MLP_HID), jnp.float32),
        "fc2_w": n(ks[7], (MLP_HID, EMBED)),
        "fc2_b": jnp.zeros((1, EMBED), jnp.float32),
        "lnf_g": jnp.ones((1, EMBED), jnp.float32),
        "lnf_b": jnp.zeros((1, EMBED), jnp.float32),
    }


# ----------------------------- main -------------------------------------------
if __name__ == "__main__":
    key = jax.random.PRNGKey(0)
    k_img, k_image, k_par = jax.random.split(key, 3)

    N = 2
    img = jax.random.normal(k_img, (N, C_IN, IMG, IMG), dtype=jnp.float32)      # NCHW
    image = jax.random.normal(k_image, (N, C_IN, IMG, IMG), dtype=jnp.float32)  # NCHW
    tokens = jnp.zeros((N, SEQ), jnp.int32)
    segment_ids = jnp.zeros((N, SEQ), jnp.int32)
    input_mask = jnp.ones((N, SEQ), jnp.int32)

    params = init_params(k_par)

    (ret, seg_map, v_feat1) = vqa10_forward(img, image, tokens, segment_ids,
                                            input_mask, params)
    jax.block_until_ready(seg_map)
    jax.block_until_ready(v_feat1)

    assert ret == (1, 2)
    assert seg_map.shape == (N, IMG, IMG) and seg_map.dtype == jnp.int32
    assert v_feat1.shape == (N, NUM_PATCHES + 1, EMBED)
    print("KERNEL_OK")
</pallas_src>

<mosaic_0001>
module attributes {stable_mosaic.version = 11 : i64} {
  func.func @_seg_argmax_kernel(%arg0: i32, %arg1: memref<1x3x256xf32, #tpu.memory_space<vmem>>, %arg2: memref<3x4xf32, #tpu.memory_space<smem>>, %arg3: memref<4xf32, #tpu.memory_space<smem>>, %arg4: memref<1x1x256xi32, #tpu.memory_space<vmem>>) attributes {dimension_semantics = [#tpu.dimension_semantics<parallel>], iteration_bounds = array<i64: 2>, scalar_prefetch = 0 : i64, scratch_operands = 0 : i64, tpu.core_type = #tpu.core_type<tc>, window_params = [{transform_indices = @transform_0, window_bounds = array<i64: 1, 3, 256>}, {transform_indices = @transform_1, window_bounds = array<i64: 3, 4>}, {transform_indices = @transform_2, window_bounds = array<i64: 4>}, {transform_indices = @transform_3, window_bounds = array<i64: 1, 1, 256>}]} {
    %c0 = arith.constant 0 : index
    %c0_0 = arith.constant 0 : index
    %c0_1 = arith.constant 0 : index
    %0 = vector.load %arg1[%c0, %c0_0, %c0_1] : memref<1x3x256xf32, #tpu.memory_space<vmem>>, vector<1x3x256xf32>
    %1 = vector.shape_cast %0 : vector<1x3x256xf32> to vector<3x256xf32>
    %2 = vector.extract_strided_slice %1 {offsets = [0, 0], sizes = [1, 256], strides = [1, 1]} : vector<3x256xf32> to vector<1x256xf32>
    %3 = vector.extract_strided_slice %1 {offsets = [1, 0], sizes = [1, 256], strides = [1, 1]} : vector<3x256xf32> to vector<1x256xf32>
    %4 = vector.extract_strided_slice %1 {offsets = [2, 0], sizes = [1, 256], strides = [1, 1]} : vector<3x256xf32> to vector<1x256xf32>
    %c0_2 = arith.constant 0 : index
    %c0_3 = arith.constant 0 : index
    %5 = memref.load %arg2[%c0_2, %c0_3] : memref<3x4xf32, #tpu.memory_space<smem>>
    %6 = vector.broadcast %5 : f32 to vector<1x256xf32>
    %7 = arith.mulf %2, %6 : vector<1x256xf32>
    %c0_4 = arith.constant 0 : index
    %8 = memref.load %arg3[%c0_4] : memref<4xf32, #tpu.memory_space<smem>>
    %9 = vector.broadcast %8 : f32 to vector<1x256xf32>
    %10 = arith.addf %7, %9 : vector<1x256xf32>
    %c1 = arith.constant 1 : index
    %c0_5 = arith.constant 0 : index
    %11 = memref.load %arg2[%c1, %c0_5] : memref<3x4xf32, #tpu.memory_space<smem>>
    %12 = vector.broadcast %11 : f32 to vector<1x256xf32>
    %13 = arith.mulf %3, %12 : vector<1x256xf32>
    %14 = arith.addf %10, %13 : vector<1x256xf32>
    %c2 = arith.constant 2 : index
    %c0_6 = arith.constant 0 : index
    %15 = memref.load %arg2[%c2, %c0_6] : memref<3x4xf32, #tpu.memory_space<smem>>
    %16 = vector.broadcast %15 : f32 to vector<1x256xf32>
    %17 = arith.mulf %4, %16 : vector<1x256xf32>
    %18 = arith.addf %14, %17 : vector<1x256xf32>
    %c0_i32 = arith.constant 0 : i32
    %19 = vector.broadcast %c0_i32 : i32 to vector<1x256xi32>
    %c0_7 = arith.constant 0 : index
    %c1_8 = arith.constant 1 : index
    %20 = memref.load %arg2[%c0_7, %c1_8] : memref<3x4xf32, #tpu.memory_space<smem>>
    %21 = vector.broadcast %20 : f32 to vector<1x256xf32>
    %22 = arith.mulf %2, %21 : vector<1x256xf32>
    %c1_9 = arith.constant 1 : index
    %23 = memref.load %arg3[%c1_9] : memref<4xf32, #tpu.memory_space<smem>>
    %24 = vector.broadcast %23 : f32 to vector<1x256xf32>
    %25 = arith.addf %22, %24 : vector<1x256xf32>
    %c1_10 = arith.constant 1 : index
    %c1_11 = arith.constant 1 : index
    %26 = memref.load %arg2[%c1_10, %c1_11] : memref<3x4xf32, #tpu.memory_space<smem>>
    %27 = vector.broadcast %26 : f32 to vector<1x256xf32>
    %28 = arith.mulf %3, %27 : vector<1x256xf32>
    %29 = arith.addf %25, %28 : vector<1x256xf32>
    %c2_12 = arith.constant 2 : index
    %c1_13 = arith.constant 1 : index
    %30 = memref.load %arg2[%c2_12, %c1_13] : memref<3x4xf32, #tpu.memory_space<smem>>
    %31 = vector.broadcast %30 : f32 to vector<1x256xf32>
    %32 = arith.mulf %4, %31 : vector<1x256xf32>
    %33 = arith.addf %29, %32 : vector<1x256xf32>
    %34 = arith.cmpf ogt, %33, %18 : vector<1x256xf32>
    %35 = arith.select %34, %33, %18 : vector<1x256xi1>, vector<1x256xf32>
    %c1_i32 = arith.constant 1 : i32
    %36 = vector.broadcast %c1_i32 : i32 to vector<1x256xi32>
    %37 = arith.select %34, %36, %19 : vector<1x256xi1>, vector<1x256xi32>
    %c0_14 = arith.constant 0 : index
    %c2_15 = arith.constant 2 : index
    %38 = memref.load %arg2[%c0_14, %c2_15] : memref<3x4xf32, #tpu.memory_space<smem>>
    %39 = vector.broadcast %38 : f32 to vector<1x256xf32>
    %40 = arith.mulf %2, %39 : vector<1x256xf32>
    %c2_16 = arith.constant 2 : index
    %41 = memref.load %arg3[%c2_16] : memref<4xf32, #tpu.memory_space<smem>>
    %42 = vector.broadcast %41 : f32 to vector<1x256xf32>
    %43 = arith.addf %40, %42 : vector<1x256xf32>
    %c1_17 = arith.constant 1 : index
    %c2_18 = arith.constant 2 : index
    %44 = memref.load %arg2[%c1_17, %c2_18] : memref<3x4xf32, #tpu.memory_space<smem>>
    %45 = vector.broadcast %44 : f32 to vector<1x256xf32>
    %46 = arith.mulf %3, %45 : vector<1x256xf32>
    %47 = arith.addf %43, %46 : vector<1x256xf32>
    %c2_19 = arith.constant 2 : index
    %c2_20 = arith.constant 2 : index
    %48 = memref.load %arg2[%c2_19, %c2_20] : memref<3x4xf32, #tpu.memory_space<smem>>
    %49 = vector.broadcast %48 : f32 to vector<1x256xf32>
    %50 = arith.mulf %4, %49 : vector<1x256xf32>
    %51 = arith.addf %47, %50 : vector<1x256xf32>
    %52 = arith.cmpf ogt, %51, %35 : vector<1x256xf32>
    %53 = arith.select %52, %51, %35 : vector<1x256xi1>, vector<1x256xf32>
    %c2_i32 = arith.constant 2 : i32
    %54 = vector.broadcast %c2_i32 : i32 to vector<1x256xi32>
    %55 = arith.select %52, %54, %37 : vector<1x256xi1>, vector<1x256xi32>
    %c0_21 = arith.constant 0 : index
    %c3 = arith.constant 3 : index
    %56 = memref.load %arg2[%c0_21, %c3] : memref<3x4xf32, #tpu.memory_space<smem>>
    %57 = vector.broadcast %56 : f32 to vector<1x256xf32>
    %58 = arith.mulf %2, %57 : vector<1x256xf32>
    %c3_22 = arith.constant 3 : index
    %59 = memref.load %arg3[%c3_22] : memref<4xf32, #tpu.memory_space<smem>>
    %60 = vector.broadcast %59 : f32 to vector<1x256xf32>
    %61 = arith.addf %58, %60 : vector<1x256xf32>
    %c1_23 = arith.constant 1 : index
    %c3_24 = arith.constant 3 : index
    %62 = memref.load %arg2[%c1_23, %c3_24] : memref<3x4xf32, #tpu.memory_space<smem>>
    %63 = vector.broadcast %62 : f32 to vector<1x256xf32>
    %64 = arith.mulf %3, %63 : vector<1x256xf32>
    %65 = arith.addf %61, %64 : vector<1x256xf32>
    %c2_25 = arith.constant 2 : index
    %c3_26 = arith.constant 3 : index
    %66 = memref.load %arg2[%c2_25, %c3_26] : memref<3x4xf32, #tpu.memory_space<smem>>
    %67 = vector.broadcast %66 : f32 to vector<1x256xf32>
    %68 = arith.mulf %4, %67 : vector<1x256xf32>
    %69 = arith.addf %65, %68 : vector<1x256xf32>
    %70 = arith.cmpf ogt, %69, %53 : vector<1x256xf32>
    %c3_i32 = arith.constant 3 : i32
    %71 = vector.broadcast %c3_i32 : i32 to vector<1x256xi32>
    %72 = arith.select %70, %71, %55 : vector<1x256xi1>, vector<1x256xi32>
    %c0_27 = arith.constant 0 : index
    %c0_28 = arith.constant 0 : index
    %c0_29 = arith.constant 0 : index
    %73 = vector.load %arg4[%c0_27, %c0_28, %c0_29] : memref<1x1x256xi32, #tpu.memory_space<vmem>>, vector<1x1x256xi32>
    %74 = vector.shape_cast %73 : vector<1x1x256xi32> to vector<1x256xi32>
    %75 = vector.shape_cast %72 : vector<1x256xi32> to vector<1x1x256xi32>
    tpu.vector_store %arg4[%c0_27, %c0_28, %c0_29], %75 {strides = array<i32>} : memref<1x1x256xi32, #tpu.memory_space<vmem>>, vector<1x1x256xi32>,
    return
  }
  func.func @transform_0(%arg0: i32) -> (i32, i32, i32) {
    %c0_i32 = arith.constant 0 : i32
    %c0_i32_0 = arith.constant 0 : i32
    %c0_i32_1 = arith.constant 0 : i32
    return %arg0, %c0_i32, %c0_i32_0 : i32, i32, i32
  }
  func.func @transform_1(%arg0: i32) -> (i32, i32) {
    %c0_i32 = arith.constant 0 : i32
    %c0_i32_0 = arith.constant 0 : i32
    %c0_i32_1 = arith.constant 0 : i32
    return %c0_i32, %c0_i32_0 : i32, i32
  }
  func.func @transform_2(%arg0: i32) -> i32 {
    %c0_i32 = arith.constant 0 : i32
    %c0_i32_0 = arith.constant 0 : i32
    return %c0_i32 : i32
  }
  func.func @transform_3(%arg0: i32) -> (i32, i32, i32) {
    %c0_i32 = arith.constant 0 : i32
    %c0_i32_0 = arith.constant 0 : i32
    %c0_i32_1 = arith.constant 0 : i32
    return %arg0, %c0_i32, %c0_i32_0 : i32, i32, i32
  }
}

module attributes {stable_mosaic.version = 11 : i64} {
  func.func @_vit_block_kernel(%arg0: i32, %arg1: memref<1x16x48xf32, #tpu.memory_space<vmem>>, %arg2: memref<1x32xf32, #tpu.memory_space<vmem>>, %arg3: memref<17x32xf32, #tpu.memory_space<vmem>>, %arg4: memref<48x32xf32, #tpu.memory_space<vmem>>, %arg5: memref<1x32xf32, #tpu.memory_space<vmem>>, %arg6: memref<1x32xf32, #tpu.memory_space<vmem>>, %arg7: memref<1x32xf32, #tpu.memory_space<vmem>>, %arg8: memref<32x96xf32, #tpu.memory_space<vmem>>, %arg9: memref<1x96xf32, #tpu.memory_space<vmem>>, %arg10: memref<32x32xf32, #tpu.memory_space<vmem>>, %arg11: memref<1x32xf32, #tpu.memory_space<vmem>>, %arg12: memref<1x32xf32, #tpu.memory_space<vmem>>, %arg13: memref<1x32xf32, #tpu.memory_space<vmem>>, %arg14: memref<32x128xf32, #tpu.memory_space<vmem>>, %arg15: memref<1x128xf32, #tpu.memory_space<vmem>>, %arg16: memref<128x32xf32, #tpu.memory_space<vmem>>, %arg17: memref<1x32xf32, #tpu.memory_space<vmem>>, %arg18: memref<1x32xf32, #tpu.memory_space<vmem>>, %arg19: memref<1x32xf32, #tpu.memory_space<vmem>>, %arg20: memref<1x17x32xf32, #tpu.memory_space<vmem>>) attributes {dimension_semantics = [#tpu.dimension_semantics<parallel>], iteration_bounds = array<i64: 2>, scalar_prefetch = 0 : i64, scratch_operands = 0 : i64, tpu.core_type = #tpu.core_type<tc>, window_params = [{transform_indices = @transform_0, window_bounds = array<i64: 1, 16, 48>}, {pipeline_mode = #tpu.pipeline_mode<synchronous>, transform_indices = @transform_1, window_bounds = array<i64: 1, 32>}, {pipeline_mode = #tpu.pipeline_mode<synchronous>, transform_indices = @transform_2, window_bounds = array<i64: 17, 32>}, {pipeline_mode = #tpu.pipeline_mode<synchronous>, transform_indices = @transform_3, window_bounds = array<i64: 48, 32>}, {pipeline_mode = #tpu.pipeline_mode<synchronous>, transform_indices = @transform_4, window_bounds = array<i64: 1, 32>}, {pipeline_mode = #tpu.pipeline_mode<synchronous>, transform_indices = @transform_5, window_bounds = array<i64: 1, 32>}, {pipeline_mode = #tpu.pipeline_mode<synchronous>, transform_indices = @transform_6, window_bounds = array<i64: 1, 32>}, {pipeline_mode = #tpu.pipeline_mode<synchronous>, transform_indices = @transform_7, window_bounds = array<i64: 32, 96>}, {pipeline_mode = #tpu.pipeline_mode<synchronous>, transform_indices = @transform_8, window_bounds = array<i64: 1, 96>}, {pipeline_mode = #tpu.pipeline_mode<synchronous>, transform_indices = @transform_9, window_bounds = array<i64: 32, 32>}, {pipeline_mode = #tpu.pipeline_mode<synchronous>, transform_indices = @transform_10, window_bounds = array<i64: 1, 32>}, {pipeline_mode = #tpu.pipeline_mode<synchronous>, transform_indices = @transform_11, window_bounds = array<i64: 1, 32>}, {pipeline_mode = #tpu.pipeline_mode<synchronous>, transform_indices = @transform_12, window_bounds = array<i64: 1, 32>}, {pipeline_mode = #tpu.pipeline_mode<synchronous>, transform_indices = @transform_13, window_bounds = array<i64: 32, 128>}, {pipeline_mode = #tpu.pipeline_mode<synchronous>, transform_indices = @transform_14, window_bounds = array<i64: 1, 128>}, {pipeline_mode = #tpu.pipeline_mode<synchronous>, transform_indices = @transform_15, window_bounds = array<i64: 128, 32>}, {pipeline_mode = #tpu.pipeline_mode<synchronous>, transform_indices = @transform_16, window_bounds = array<i64: 1, 32>}, {pipeline_mode = #tpu.pipeline_mode<synchronous>, transform_indices = @transform_17, window_bounds = array<i64: 1, 32>}, {pipeline_mode = #tpu.pipeline_mode<synchronous>, transform_indices = @transform_18, window_bounds = array<i64: 1, 32>}, {transform_indices = @transform_19, window_bounds = array<i64: 1, 17, 32>}]} {
    %c0 = arith.constant 0 : index
    %c0_0 = arith.constant 0 : index
    %c0_1 = arith.constant 0 : index
    %0 = vector.load %arg1[%c0, %c0_0, %c0_1] : memref<1x16x48xf32, #tpu.memory_space<vmem>>, vector<1x16x48xf32>
    %1 = vector.shape_cast %0 : vector<1x16x48xf32> to vector<16x48xf32>
    %c0_2 = arith.constant 0 : index
    %c0_3 = arith.constant 0 : index
    %2 = vector.load %arg4[%c0_2, %c0_3] : memref<48x32xf32, #tpu.memory_space<vmem>>, vector<48x32xf32>
    %cst = arith.constant dense<0.000000e+00> : vector<16x32xf32>
    %3 = tpu.matmul %1, %2, %cst {dimension_numbers = #tpu.dot_dimension_numbers<[1], [0], [0], [1], [0, 0, 1, 1], [], []>} : vector<16x48xf32>, vector<48x32xf32>, vector<16x32xf32> -> vector<16x32xf32>
    %c0_4 = arith.constant 0 : index
    %c0_5 = arith.constant 0 : index
    %4 = vector.load %arg5[%c0_4, %c0_5] : memref<1x32xf32, #tpu.memory_space<vmem>>, vector<1x32xf32>
    %5 = vector.broadcast %4 : vector<1x32xf32> to vector<16x32xf32>
    %6 = arith.addf %3, %5 : vector<16x32xf32>
    %c0_6 = arith.constant 0 : index
    %c0_7 = arith.constant 0 : index
    %7 = vector.load %arg2[%c0_6, %c0_7] : memref<1x32xf32, #tpu.memory_space<vmem>>, vector<1x32xf32>
    %c0_8 = arith.constant 0 : index
    %c0_9 = arith.constant 0 : index
    %c0_10 = arith.constant 0 : index
    %8 = vector.load %arg20[%c0_8, %c0_9, %c0_10] : memref<1x17x32xf32, #tpu.memory_space<vmem>>, vector<1x1x32xf32>
    %9 = vector.shape_cast %8 : vector<1x1x32xf32> to vector<1x32xf32>
    %10 = vector.shape_cast %7 : vector<1x32xf32> to vector<1x1x32xf32>
    tpu.vector_store %arg20[%c0_8, %c0_9, %c0_10], %10 {strides = array<i32>} : memref<1x17x32xf32, #tpu.memory_space<vmem>>, vector<1x1x32xf32>,
    %c0_11 = arith.constant 0 : index
    %c1 = arith.constant 1 : index
    %c0_12 = arith.constant 0 : index
    %11 = vector.load %arg20[%c0_11, %c1, %c0_12] : memref<1x17x32xf32, #tpu.memory_space<vmem>>, vector<1x16x32xf32>
    %12 = vector.shape_cast %11 : vector<1x16x32xf32> to vector<16x32xf32>
    %13 = vector.shape_cast %6 : vector<16x32xf32> to vector<1x16x32xf32>
    tpu.vector_store %arg20[%c0_11, %c1, %c0_12], %13 {strides = array<i32>} : memref<1x17x32xf32, #tpu.memory_space<vmem>>, vector<1x16x32xf32>,
    %c0_13 = arith.constant 0 : index
    %c0_14 = arith.constant 0 : index
    %c0_15 = arith.constant 0 : index
    %14 = vector.load %arg20[%c0_13, %c0_14, %c0_15] : memref<1x17x32xf32, #tpu.memory_space<vmem>>, vector<1x17x32xf32>
    %15 = vector.shape_cast %14 : vector<1x17x32xf32> to vector<17x32xf32>
    %c0_16 = arith.constant 0 : index
    %c0_17 = arith.constant 0 : index
    %16 = vector.load %arg3[%c0_16, %c0_17] : memref<17x32xf32, #tpu.memory_space<vmem>>, vector<17x32xf32>
    %17 = arith.addf %15, %16 : vector<17x32xf32>
    %c0_18 = arith.constant 0 : index
    %c0_19 = arith.constant 0 : index
    %18 = vector.load %arg6[%c0_18, %c0_19] : memref<1x32xf32, #tpu.memory_space<vmem>>, vector<1x32xf32>
    %c0_20 = arith.constant 0 : index
    %c0_21 = arith.constant 0 : index
    %19 = vector.load %arg7[%c0_20, %c0_21] : memref<1x32xf32, #tpu.memory_space<vmem>>, vector<1x32xf32>
    %cst_22 = arith.constant dense<0.000000e+00> : vector<17xf32>
    %20 = vector.multi_reduction <add>, %17, %cst_22 [1] : vector<17x32xf32> to vector<17xf32>
    %21 = vector.shape_cast %20 : vector<17xf32> to vector<17x1xf32>
    %cst_23 = arith.constant 3.200000e+01 : f32
    %22 = vector.broadcast %cst_23 : f32 to vector<17x1xf32>
    %23 = arith.divf %21, %22 : vector<17x1xf32>
    %24 = vector.broadcast %23 : vector<17x1xf32> to vector<17x32xf32>
    %25 = arith.subf %17, %24 : vector<17x32xf32>
    %26 = arith.mulf %25, %25 : vector<17x32xf32>
    %cst_24 = arith.constant dense<0.000000e+00> : vector<17xf32>
    %27 = vector.multi_reduction <add>, %26, %cst_24 [1] : vector<17x32xf32> to vector<17xf32>
    %28 = vector.shape_cast %27 : vector<17xf32> to vector<17x1xf32>
    %cst_25 = arith.constant 3.200000e+01 : f32
    %29 = vector.broadcast %cst_25 : f32 to vector<17x1xf32>
    %30 = arith.divf %28, %29 : vector<17x1xf32>
    %31 = vector.broadcast %23 : vector<17x1xf32> to vector<17x32xf32>
    %32 = arith.subf %17, %31 : vector<17x32xf32>
    %cst_26 = arith.constant 9.99999997E-7 : f32
    %33 = vector.broadcast %cst_26 : f32 to vector<17x1xf32>
    %34 = arith.addf %30, %33 : vector<17x1xf32>
    %35 = math.rsqrt %34 : vector<17x1xf32>
    %36 = vector.broadcast %35 : vector<17x1xf32> to vector<17x32xf32>
    %37 = arith.mulf %32, %36 : vector<17x32xf32>
    %38 = vector.broadcast %18 : vector<1x32xf32> to vector<17x32xf32>
    %39 = arith.mulf %37, %38 : vector<17x32xf32>
    %40 = vector.broadcast %19 : vector<1x32xf32> to vector<17x32xf32>
    %41 = arith.addf %39, %40 : vector<17x32xf32>
    %c0_27 = arith.constant 0 : index
    %c0_28 = arith.constant 0 : index
    %42 = vector.load %arg8[%c0_27, %c0_28] : memref<32x96xf32, #tpu.memory_space<vmem>>, vector<32x96xf32>
    %cst_29 = arith.constant dense<0.000000e+00> : vector<17x96xf32>
    %43 = tpu.matmul %41, %42, %cst_29 {dimension_numbers = #tpu.dot_dimension_numbers<[1], [0], [0], [1], [0, 0, 1, 1], [], []>} : vector<17x32xf32>, vector<32x96xf32>, vector<17x96xf32> -> vector<17x96xf32>
    %c0_30 = arith.constant 0 : index
    %c0_31 = arith.constant 0 : index
    %44 = vector.load %arg9[%c0_30, %c0_31] : memref<1x96xf32, #tpu.memory_space<vmem>>, vector<1x96xf32>
    %45 = vector.broadcast %44 : vector<1x96xf32> to vector<17x96xf32>
    %46 = arith.addf %43, %45 : vector<17x96xf32>
    %47 = vector.extract_strided_slice %46 {offsets = [0, 0], sizes = [17, 8], strides = [1, 1]} : vector<17x96xf32> to vector<17x8xf32>
    %48 = vector.extract_strided_slice %46 {offsets = [0, 32], sizes = [17, 8], strides = [1, 1]} : vector<17x96xf32> to vector<17x8xf32>
    %49 = vector.extract_strided_slice %46 {offsets = [0, 64], sizes = [17, 8], strides = [1, 1]} : vector<17x96xf32> to vector<17x8xf32>
    %cst_32 = arith.constant dense<0.000000e+00> : vector<17x17xf32>
    %50 = tpu.matmul %47, %48, %cst_32 {dimension_numbers = #tpu.dot_dimension_numbers<[1], [1], [0], [0], [0, 0, 1, 0], [], []>} : vector<17x8xf32>, vector<17x8xf32>, vector<17x17xf32> -> vector<17x17xf32>
    %cst_33 = arith.constant 0.353553385 : f32
    %51 = vector.broadcast %cst_33 : f32 to vector<17x17xf32>
    %52 = arith.mulf %50, %51 : vector<17x17xf32>
    %cst_34 = arith.constant dense<0xFF800000> : vector<17xf32>
    %53 = vector.multi_reduction <maximumf>, %52, %cst_34 [1] : vector<17x17xf32> to vector<17xf32>
    %54 = vector.shape_cast %53 : vector<17xf32> to vector<17x1xf32>
    %55 = vector.broadcast %54 : vector<17x1xf32> to vector<17x17xf32>
    %56 = arith.subf %52, %55 : vector<17x17xf32>
    %57 = math.exp %56 : vector<17x17xf32>
    %cst_35 = arith.constant dense<0.000000e+00> : vector<17xf32>
    %58 = vector.multi_reduction <add>, %57, %cst_35 [1] : vector<17x17xf32> to vector<17xf32>
    %59 = vector.shape_cast %58 : vector<17xf32> to vector<17x1xf32>
    %60 = tpu.reciprocal %59 {approx = true} : vector<17x1xf32> -> vector<17x1xf32>
    %61 = vector.broadcast %60 : vector<17x1xf32> to vector<17x17xf32>
    %62 = arith.mulf %57, %61 : vector<17x17xf32>
    %cst_36 = arith.constant dense<0.000000e+00> : vector<17x8xf32>
    %63 = tpu.matmul %62, %49, %cst_36 {dimension_numbers = #tpu.dot_dimension_numbers<[1], [0], [0], [1], [0, 0, 1, 1], [], []>} : vector<17x17xf32>, vector<17x8xf32>, vector<17x8xf32> -> vector<17x8xf32>
    %c0_37 = arith.constant 0 : index
    %c0_38 = arith.constant 0 : index
    %64 = vector.load %arg10[%c0_37, %c0_38] : memref<32x32xf32, #tpu.memory_space<vmem>>, vector<8x32xf32>
    %cst_39 = arith.constant dense<0.000000e+00> : vector<17x32xf32>
    %65 = tpu.matmul %63, %64, %cst_39 {dimension_numbers = #tpu.dot_dimension_numbers<[1], [0], [0], [1], [0, 0, 1, 1], [], []>} : vector<17x8xf32>, vector<8x32xf32>, vector<17x32xf32> -> vector<17x32xf32>
    %66 = vector.extract_strided_slice %46 {offsets = [0, 8], sizes = [17, 8], strides = [1, 1]} : vector<17x96xf32> to vector<17x8xf32>
    %67 = vector.extract_strided_slice %46 {offsets = [0, 40], sizes = [17, 8], strides = [1, 1]} : vector<17x96xf32> to vector<17x8xf32>
    %68 = vector.extract_strided_slice %46 {offsets = [0, 72], sizes = [17, 8], strides = [1, 1]} : vector<17x96xf32> to vector<17x8xf32>
    %cst_40 = arith.constant dense<0.000000e+00> : vector<17x17xf32>
    %69 = tpu.matmul %66, %67, %cst_40 {dimension_numbers = #tpu.dot_dimension_numbers<[1], [1], [0], [0], [0, 0, 1, 0], [], []>} : vector<17x8xf32>, vector<17x8xf32>, vector<17x17xf32> -> vector<17x17xf32>
    %cst_41 = arith.constant 0.353553385 : f32
    %70 = vector.broadcast %cst_41 : f32 to vector<17x17xf32>
    %71 = arith.mulf %69, %70 : vector<17x17xf32>
    %cst_42 = arith.constant dense<0xFF800000> : vector<17xf32>
    %72 = vector.multi_reduction <maximumf>, %71, %cst_42 [1] : vector<17x17xf32> to vector<17xf32>
    %73 = vector.shape_cast %72 : vector<17xf32> to vector<17x1xf32>
    %74 = vector.broadcast %73 : vector<17x1xf32> to vector<17x17xf32>
    %75 = arith.subf %71, %74 : vector<17x17xf32>
    %76 = math.exp %75 : vector<17x17xf32>
    %cst_43 = arith.constant dense<0.000000e+00> : vector<17xf32>
    %77 = vector.multi_reduction <add>, %76, %cst_43 [1] : vector<17x17xf32> to vector<17xf32>
    %78 = vector.shape_cast %77 : vector<17xf32> to vector<17x1xf32>
    %79 = tpu.reciprocal %78 {approx = true} : vector<17x1xf32> -> vector<17x1xf32>
    %80 = vector.broadcast %79 : vector<17x1xf32> to vector<17x17xf32>
    %81 = arith.mulf %76, %80 : vector<17x17xf32>
    %cst_44 = arith.constant dense<0.000000e+00> : vector<17x8xf32>
    %82 = tpu.matmul %81, %68, %cst_44 {dimension_numbers = #tpu.dot_dimension_numbers<[1], [0], [0], [1], [0, 0, 1, 1], [], []>} : vector<17x17xf32>, vector<17x8xf32>, vector<17x8xf32> -> vector<17x8xf32>
    %c8 = arith.constant 8 : index
    %c0_45 = arith.constant 0 : index
    %83 = vector.load %arg10[%c8, %c0_45] : memref<32x32xf32, #tpu.memory_space<vmem>>, vector<8x32xf32>
    %cst_46 = arith.constant dense<0.000000e+00> : vector<17x32xf32>
    %84 = tpu.matmul %82, %83, %cst_46 {dimension_numbers = #tpu.dot_dimension_numbers<[1], [0], [0], [1], [0, 0, 1, 1], [], []>} : vector<17x8xf32>, vector<8x32xf32>, vector<17x32xf32> -> vector<17x32xf32>
    %85 = arith.addf %65, %84 : vector<17x32xf32>
    %86 = vector.extract_strided_slice %46 {offsets = [0, 16], sizes = [17, 8], strides = [1, 1]} : vector<17x96xf32> to vector<17x8xf32>
    %87 = vector.extract_strided_slice %46 {offsets = [0, 48], sizes = [17, 8], strides = [1, 1]} : vector<17x96xf32> to vector<17x8xf32>
    %88 = vector.extract_strided_slice %46 {offsets = [0, 80], sizes = [17, 8], strides = [1, 1]} : vector<17x96xf32> to vector<17x8xf32>
    %cst_47 = arith.constant dense<0.000000e+00> : vector<17x17xf32>
    %89 = tpu.matmul %86, %87, %cst_47 {dimension_numbers = #tpu.dot_dimension_numbers<[1], [1], [0], [0], [0, 0, 1, 0], [], []>} : vector<17x8xf32>, vector<17x8xf32>, vector<17x17xf32> -> vector<17x17xf32>
    %cst_48 = arith.constant 0.353553385 : f32
    %90 = vector.broadcast %cst_48 : f32 to vector<17x17xf32>
    %91 = arith.mulf %89, %90 : vector<17x17xf32>
    %cst_49 = arith.constant dense<0xFF800000> : vector<17xf32>
    %92 = vector.multi_reduction <maximumf>, %91, %cst_49 [1] : vector<17x17xf32> to vector<17xf32>
    %93 = vector.shape_cast %92 : vector<17xf32> to vector<17x1xf32>
    %94 = vector.broadcast %93 : vector<17x1xf32> to vector<17x17xf32>
    %95 = arith.subf %91, %94 : vector<17x17xf32>
    %96 = math.exp %95 : vector<17x17xf32>
    %cst_50 = arith.constant dense<0.000000e+00> : vector<17xf32>
    %97 = vector.multi_reduction <add>, %96, %cst_50 [1] : vector<17x17xf32> to vector<17xf32>
    %98 = vector.shape_cast %97 : vector<17xf32> to vector<17x1xf32>
    %99 = tpu.reciprocal %98 {approx = true} : vector<17x1xf32> -> vector<17x1xf32>
    %100 = vector.broadcast %99 : vector<17x1xf32> to vector<17x17xf32>
    %101 = arith.mulf %96, %100 : vector<17x17xf32>
    %cst_51 = arith.constant dense<0.000000e+00> : vector<17x8xf32>
    %102 = tpu.matmul %101, %88, %cst_51 {dimension_numbers = #tpu.dot_dimension_numbers<[1], [0], [0], [1], [0, 0, 1, 1], [], []>} : vector<17x17xf32>, vector<17x8xf32>, vector<17x8xf32> -> vector<17x8xf32>
    %c16 = arith.constant 16 : index
    %c0_52 = arith.constant 0 : index
    %103 = vector.load %arg10[%c16, %c0_52] : memref<32x32xf32, #tpu.memory_space<vmem>>, vector<8x32xf32>
    %cst_53 = arith.constant dense<0.000000e+00> : vector<17x32xf32>
    %104 = tpu.matmul %102, %103, %cst_53 {dimension_numbers = #tpu.dot_dimension_numbers<[1], [0], [0], [1], [0, 0, 1, 1], [], []>} : vector<17x8xf32>, vector<8x32xf32>, vector<17x32xf32> -> vector<17x32xf32>
    %105 = arith.addf %85, %104 : vector<17x32xf32>
    %106 = vector.extract_strided_slice %46 {offsets = [0, 24], sizes = [17, 8], strides = [1, 1]} : vector<17x96xf32> to vector<17x8xf32>
    %107 = vector.extract_strided_slice %46 {offsets = [0, 56], sizes = [17, 8], strides = [1, 1]} : vector<17x96xf32> to vector<17x8xf32>
    %108 = vector.extract_strided_slice %46 {offsets = [0, 88], sizes = [17, 8], strides = [1, 1]} : vector<17x96xf32> to vector<17x8xf32>
    %cst_54 = arith.constant dense<0.000000e+00> : vector<17x17xf32>
    %109 = tpu.matmul %106, %107, %cst_54 {dimension_numbers = #tpu.dot_dimension_numbers<[1], [1], [0], [0], [0, 0, 1, 0], [], []>} : vector<17x8xf32>, vector<17x8xf32>, vector<17x17xf32> -> vector<17x17xf32>
    %cst_55 = arith.constant 0.353553385 : f32
    %110 = vector.broadcast %cst_55 : f32 to vector<17x17xf32>
    %111 = arith.mulf %109, %110 : vector<17x17xf32>
    %cst_56 = arith.constant dense<0xFF800000> : vector<17xf32>
    %112 = vector.multi_reduction <maximumf>, %111, %cst_56 [1] : vector<17x17xf32> to vector<17xf32>
    %113 = vector.shape_cast %112 : vector<17xf32> to vector<17x1xf32>
    %114 = vector.broadcast %113 : vector<17x1xf32> to vector<17x17xf32>
    %115 = arith.subf %111, %114 : vector<17x17xf32>
    %116 = math.exp %115 : vector<17x17xf32>
    %cst_57 = arith.constant dense<0.000000e+00> : vector<17xf32>
    %117 = vector.multi_reduction <add>, %116, %cst_57 [1] : vector<17x17xf32> to vector<17xf32>
    %118 = vector.shape_cast %117 : vector<17xf32> to vector<17x1xf32>
    %119 = tpu.reciprocal %118 {approx = true} : vector<17x1xf32> -> vector<17x1xf32>
    %120 = vector.broadcast %119 : vector<17x1xf32> to vector<17x17xf32>
    %121 = arith.mulf %116, %120 : vector<17x17xf32>
    %cst_58 = arith.constant dense<0.000000e+00> : vector<17x8xf32>
    %122 = tpu.matmul %121, %108, %cst_58 {dimension_numbers = #tpu.dot_dimension_numbers<[1], [0], [0], [1], [0, 0, 1, 1], [], []>} : vector<17x17xf32>, vector<17x8xf32>, vector<17x8xf32> -> vector<17x8xf32>
    %c24 = arith.constant 24 : index
    %c0_59 = arith.constant 0 : index
    %123 = vector.load %arg10[%c24, %c0_59] : memref<32x32xf32, #tpu.memory_space<vmem>>, vector<8x32xf32>
    %cst_60 = arith.constant dense<0.000000e+00> : vector<17x32xf32>
    %124 = tpu.matmul %122, %123, %cst_60 {dimension_numbers = #tpu.dot_dimension_numbers<[1], [0], [0], [1], [0, 0, 1, 1], [], []>} : vector<17x8xf32>, vector<8x32xf32>, vector<17x32xf32> -> vector<17x32xf32>
    %125 = arith.addf %105, %124 : vector<17x32xf32>
    %126 = arith.addf %17, %125 : vector<17x32xf32>
    %c0_61 = arith.constant 0 : index
    %c0_62 = arith.constant 0 : index
    %127 = vector.load %arg11[%c0_61, %c0_62] : memref<1x32xf32, #tpu.memory_space<vmem>>, vector<1x32xf32>
    %128 = vector.broadcast %127 : vector<1x32xf32> to vector<17x32xf32>
    %129 = arith.addf %126, %128 : vector<17x32xf32>
    %c0_63 = arith.constant 0 : index
    %c0_64 = arith.constant 0 : index
    %130 = vector.load %arg12[%c0_63, %c0_64] : memref<1x32xf32, #tpu.memory_space<vmem>>, vector<1x32xf32>
    %c0_65 = arith.constant 0 : index
    %c0_66 = arith.constant 0 : index
    %131 = vector.load %arg13[%c0_65, %c0_66] : memref<1x32xf32, #tpu.memory_space<vmem>>, vector<1x32xf32>
    %cst_67 = arith.constant dense<0.000000e+00> : vector<17xf32>
    %132 = vector.multi_reduction <add>, %129, %cst_67 [1] : vector<17x32xf32> to vector<17xf32>
    %133 = vector.shape_cast %132 : vector<17xf32> to vector<17x1xf32>
    %cst_68 = arith.constant 3.200000e+01 : f32
    %134 = vector.broadcast %cst_68 : f32 to vector<17x1xf32>
    %135 = arith.divf %133, %134 : vector<17x1xf32>
    %136 = vector.broadcast %135 : vector<17x1xf32> to vector<17x32xf32>
    %137 = arith.subf %129, %136 : vector<17x32xf32>
    %138 = arith.mulf %137, %137 : vector<17x32xf32>
    %cst_69 = arith.constant dense<0.000000e+00> : vector<17xf32>
    %139 = vector.multi_reduction <add>, %138, %cst_69 [1] : vector<17x32xf32> to vector<17xf32>
    %140 = vector.shape_cast %139 : vector<17xf32> to vector<17x1xf32>
    %cst_70 = arith.constant 3.200000e+01 : f32
    %141 = vector.broadcast %cst_70 : f32 to vector<17x1xf32>
    %142 = arith.divf %140, %141 : vector<17x1xf32>
    %143 = vector.broadcast %135 : vector<17x1xf32> to vector<17x32xf32>
    %144 = arith.subf %129, %143 : vector<17x32xf32>
    %cst_71 = arith.constant 9.99999997E-7 : f32
    %145 = vector.broadcast %cst_71 : f32 to vector<17x1xf32>
    %146 = arith.addf %142, %145 : vector<17x1xf32>
    %147 = math.rsqrt %146 : vector<17x1xf32>
    %148 = vector.broadcast %147 : vector<17x1xf32> to vector<17x32xf32>
    %149 = arith.mulf %144, %148 : vector<17x32xf32>
    %150 = vector.broadcast %130 : vector<1x32xf32> to vector<17x32xf32>
    %151 = arith.mulf %149, %150 : vector<17x32xf32>
    %152 = vector.broadcast %131 : vector<1x32xf32> to vector<17x32xf32>
    %153 = arith.addf %151, %152 : vector<17x32xf32>
    %c0_72 = arith.constant 0 : index
    %c0_73 = arith.constant 0 : index
    %154 = vector.load %arg14[%c0_72, %c0_73] : memref<32x128xf32, #tpu.memory_space<vmem>>, vector<32x128xf32>
    %cst_74 = arith.constant dense<0.000000e+00> : vector<17x128xf32>
    %155 = tpu.matmul %153, %154, %cst_74 {dimension_numbers = #tpu.dot_dimension_numbers<[1], [0], [0], [1], [0, 0, 1, 1], [], []>} : vector<17x32xf32>, vector<32x128xf32>, vector<17x128xf32> -> vector<17x128xf32>
    %c0_75 = arith.constant 0 : index
    %c0_76 = arith.constant 0 : index
    %156 = vector.load %arg15[%c0_75, %c0_76] : memref<1x128xf32, #tpu.memory_space<vmem>>, vector<1x128xf32>
    %157 = vector.broadcast %156 : vector<1x128xf32> to vector<17x128xf32>
    %158 = arith.addf %155, %157 : vector<17x128xf32>
    %cst_77 = arith.constant 5.000000e-01 : f32
    %159 = vector.broadcast %cst_77 : f32 to vector<17x128xf32>
    %160 = arith.mulf %159, %158 : vector<17x128xf32>
    %cst_78 = arith.constant 0.707106769 : f32
    %161 = vector.broadcast %cst_78 : f32 to vector<17x128xf32>
    %162 = arith.mulf %158, %161 : vector<17x128xf32>
    %cst_79 = arith.constant 0.000000e+00 : f32
    %163 = vector.broadcast %cst_79 : f32 to vector<17x128xf32>
    %164 = arith.cmpf oge, %162, %163 : vector<17x128xf32>
    %cst_80 = arith.constant 1.000000e+00 : f32
    %cst_81 = arith.constant -1.000000e+00 : f32
    %165 = vector.broadcast %cst_80 : f32 to vector<17x128xf32>
    %166 = vector.broadcast %cst_81 : f32 to vector<17x128xf32>
    %167 = arith.select %164, %165, %166 : vector<17x128xi1>, vector<17x128xf32>
    %168 = math.absf %162 : vector<17x128xf32>
    %cst_82 = arith.constant 0.327591091 : f32
    %169 = vector.broadcast %cst_82 : f32 to vector<17x128xf32>
    %170 = arith.mulf %169, %168 : vector<17x128xf32>
    %cst_83 = arith.constant 1.000000e+00 : f32
    %171 = vector.broadcast %cst_83 : f32 to vector<17x128xf32>
    %172 = arith.addf %171, %170 : vector<17x128xf32>
    %cst_84 = arith.constant 1.000000e+00 : f32
    %173 = vector.broadcast %cst_84 : f32 to vector<17x128xf32>
    %174 = arith.divf %173, %172 : vector<17x128xf32>
    %cst_85 = arith.constant 1.06140542 : f32
    %175 = vector.broadcast %cst_85 : f32 to vector<17x128xf32>
    %176 = arith.mulf %175, %174 : vector<17x128xf32>
    %cst_86 = arith.constant -1.45315206 : f32
    %177 = vector.broadcast %cst_86 : f32 to vector<17x128xf32>
    %178 = arith.addf %176, %177 : vector<17x128xf32>
    %179 = arith.mulf %178, %174 : vector<17x128xf32>
    %cst_87 = arith.constant 1.42141378 : f32
    %180 = vector.broadcast %cst_87 : f32 to vector<17x128xf32>
    %181 = arith.addf %179, %180 : vector<17x128xf32>
    %182 = arith.mulf %181, %174 : vector<17x128xf32>
    %cst_88 = arith.constant -0.284496725 : f32
    %183 = vector.broadcast %cst_88 : f32 to vector<17x128xf32>
    %184 = arith.addf %182, %183 : vector<17x128xf32>
    %185 = arith.mulf %184, %174 : vector<17x128xf32>
    %cst_89 = arith.constant 0.254829586 : f32
    %186 = vector.broadcast %cst_89 : f32 to vector<17x128xf32>
    %187 = arith.addf %185, %186 : vector<17x128xf32>
    %188 = arith.mulf %187, %174 : vector<17x128xf32>
    %cst_90 = arith.constant 0.000000e+00 : f32
    %189 = vector.broadcast %cst_90 : f32 to vector<17x128xf32>
    %190 = arith.subf %189, %168 : vector<17x128xf32>
    %191 = arith.mulf %190, %168 : vector<17x128xf32>
    %192 = math.exp %191 : vector<17x128xf32>
    %193 = arith.mulf %188, %192 : vector<17x128xf32>
    %cst_91 = arith.constant 1.000000e+00 : f32
    %194 = vector.broadcast %cst_91 : f32 to vector<17x128xf32>
    %195 = arith.subf %194, %193 : vector<17x128xf32>
    %196 = arith.mulf %167, %195 : vector<17x128xf32>
    %cst_92 = arith.constant 1.000000e+00 : f32
    %197 = vector.broadcast %cst_92 : f32 to vector<17x128xf32>
    %198 = arith.addf %197, %196 : vector<17x128xf32>
    %199 = arith.mulf %160, %198 : vector<17x128xf32>
    %c0_93 = arith.constant 0 : index
    %c0_94 = arith.constant 0 : index
    %200 = vector.load %arg16[%c0_93, %c0_94] : memref<128x32xf32, #tpu.memory_space<vmem>>, vector<128x32xf32>
    %cst_95 = arith.constant dense<0.000000e+00> : vector<17x32xf32>
    %201 = tpu.matmul %199, %200, %cst_95 {dimension_numbers = #tpu.dot_dimension_numbers<[1], [0], [0], [1], [0, 0, 1, 1], [], []>} : vector<17x128xf32>, vector<128x32xf32>, vector<17x32xf32> -> vector<17x32xf32>
    %202 = arith.addf %129, %201 : vector<17x32xf32>
    %c0_96 = arith.constant 0 : index
    %c0_97 = arith.constant 0 : index
    %203 = vector.load %arg17[%c0_96, %c0_97] : memref<1x32xf32, #tpu.memory_space<vmem>>, vector<1x32xf32>
    %204 = vector.broadcast %203 : vector<1x32xf32> to vector<17x32xf32>
    %205 = arith.addf %202, %204 : vector<17x32xf32>
    %c0_98 = arith.constant 0 : index
    %c0_99 = arith.constant 0 : index
    %206 = vector.load %arg18[%c0_98, %c0_99] : memref<1x32xf32, #tpu.memory_space<vmem>>, vector<1x32xf32>
    %c0_100 = arith.constant 0 : index
    %c0_101 = arith.constant 0 : index
    %207 = vector.load %arg19[%c0_100, %c0_101] : memref<1x32xf32, #tpu.memory_space<vmem>>, vector<1x32xf32>
    %cst_102 = arith.constant dense<0.000000e+00> : vector<17xf32>
    %208 = vector.multi_reduction <add>, %205, %cst_102 [1] : vector<17x32xf32> to vector<17xf32>
    %209 = vector.shape_cast %208 : vector<17xf32> to vector<17x1xf32>
    %cst_103 = arith.constant 3.200000e+01 : f32
    %210 = vector.broadcast %cst_103 : f32 to vector<17x1xf32>
    %211 = arith.divf %209, %210 : vector<17x1xf32>
    %212 = vector.broadcast %211 : vector<17x1xf32> to vector<17x32xf32>
    %213 = arith.subf %205, %212 : vector<17x32xf32>
    %214 = arith.mulf %213, %213 : vector<17x32xf32>
    %cst_104 = arith.constant dense<0.000000e+00> : vector<17xf32>
    %215 = vector.multi_reduction <add>, %214, %cst_104 [1] : vector<17x32xf32> to vector<17xf32>
    %216 = vector.shape_cast %215 : vector<17xf32> to vector<17x1xf32>
    %cst_105 = arith.constant 3.200000e+01 : f32
    %217 = vector.broadcast %cst_105 : f32 to vector<17x1xf32>
    %218 = arith.divf %216, %217 : vector<17x1xf32>
    %219 = vector.broadcast %211 : vector<17x1xf32> to vector<17x32xf32>
    %220 = arith.subf %205, %219 : vector<17x32xf32>
    %cst_106 = arith.constant 9.99999997E-7 : f32
    %221 = vector.broadcast %cst_106 : f32 to vector<17x1xf32>
    %222 = arith.addf %218, %221 : vector<17x1xf32>
    %223 = math.rsqrt %222 : vector<17x1xf32>
    %224 = vector.broadcast %223 : vector<17x1xf32> to vector<17x32xf32>
    %225 = arith.mulf %220, %224 : vector<17x32xf32>
    %226 = vector.broadcast %206 : vector<1x32xf32> to vector<17x32xf32>
    %227 = arith.mulf %225, %226 : vector<17x32xf32>
    %228 = vector.broadcast %207 : vector<1x32xf32> to vector<17x32xf32>
    %229 = arith.addf %227, %228 : vector<17x32xf32>
    %c0_107 = arith.constant 0 : index
    %c0_108 = arith.constant 0 : index
    %c0_109 = arith.constant 0 : index
    %230 = vector.load %arg20[%c0_107, %c0_108, %c0_109] : memref<1x17x32xf32, #tpu.memory_space<vmem>>, vector<1x17x32xf32>
    %231 = vector.shape_cast %230 : vector<1x17x32xf32> to vector<17x32xf32>
    %232 = vector.shape_cast %229 : vector<17x32xf32> to vector<1x17x32xf32>
    tpu.vector_store %arg20[%c0_107, %c0_108, %c0_109], %232 {strides = array<i32>} : memref<1x17x32xf32, #tpu.memory_space<vmem>>, vector<1x17x32xf32>,
    return
  }
  func.func @transform_0(%arg0: i32) -> (i32, i32, i32) {
    %c0_i32 = arith.constant 0 : i32
    %c0_i32_0 = arith.constant 0 : i32
    %c0_i32_1 = arith.constant 0 : i32
    return %arg0, %c0_i32, %c0_i32_0 : i32, i32, i32
  }
  func.func @transform_1(%arg0: i32) -> (i32, i32) {
    %c0_i32 = arith.constant 0 : i32
    %c0_i32_0 = arith.constant 0 : i32
    %c0_i32_1 = arith.constant 0 : i32
    return %c0_i32, %c0_i32_0 : i32, i32
  }
  func.func @transform_2(%arg0: i32) -> (i32, i32) {
    %c0_i32 = arith.constant 0 : i32
    %c0_i32_0 = arith.constant 0 : i32
    %c0_i32_1 = arith.constant 0 : i32
    return %c0_i32, %c0_i32_0 : i32, i32
  }
  func.func @transform_3(%arg0: i32) -> (i32, i32) {
    %c0_i32 = arith.constant 0 : i32
    %c0_i32_0 = arith.constant 0 : i32
    %c0_i32_1 = arith.constant 0 : i32
    return %c0_i32, %c0_i32_0 : i32, i32
  }
  func.func @transform_4(%arg0: i32) -> (i32, i32) {
    %c0_i32 = arith.constant 0 : i32
    %c0_i32_0 = arith.constant 0 : i32
    %c0_i32_1 = arith.constant 0 : i32
    return %c0_i32, %c0_i32_0 : i32, i32
  }
  func.func @transform_5(%arg0: i32) -> (i32, i32) {
    %c0_i32 = arith.constant 0 : i32
    %c0_i32_0 = arith.constant 0 : i32
    %c0_i32_1 = arith.constant 0 : i32
    return %c0_i32, %c0_i32_0 : i32, i32
  }
  func.func @transform_6(%arg0: i32) -> (i32, i32) {
    %c0_i32 = arith.constant 0 : i32
    %c0_i32_0 = arith.constant 0 : i32
    %c0_i32_1 = arith.constant 0 : i32
    return %c0_i32, %c0_i32_0 : i32, i32
  }
  func.func @transform_7(%arg0: i32) -> (i32, i32) {
    %c0_i32 = arith.constant 0 : i32
    %c0_i32_0 = arith.constant 0 : i32
    %c0_i32_1 = arith.constant 0 : i32
    return %c0_i32, %c0_i32_0 : i32, i32
  }
  func.func @transform_8(%arg0: i32) -> (i32, i32) {
    %c0_i32 = arith.constant 0 : i32
    %c0_i32_0 = arith.constant 0 : i32
    %c0_i32_1 = arith.constant 0 : i32
    return %c0_i32, %c0_i32_0 : i32, i32
  }
  func.func @transform_9(%arg0: i32) -> (i32, i32) {
    %c0_i32 = arith.constant 0 : i32
    %c0_i32_0 = arith.constant 0 : i32
    %c0_i32_1 = arith.constant 0 : i32
    return %c0_i32, %c0_i32_0 : i32, i32
  }
  func.func @transform_10(%arg0: i32) -> (i32, i32) {
    %c0_i32 = arith.constant 0 : i32
    %c0_i32_0 = arith.constant 0 : i32
    %c0_i32_1 = arith.constant 0 : i32
    return %c0_i32, %c0_i32_0 : i32, i32
  }
  func.func @transform_11(%arg0: i32) -> (i32, i32) {
    %c0_i32 = arith.constant 0 : i32
    %c0_i32_0 = arith.constant 0 : i32
    %c0_i32_1 = arith.constant 0 : i32
    return %c0_i32, %c0_i32_0 : i32, i32
  }
  func.func @transform_12(%arg0: i32) -> (i32, i32) {
    %c0_i32 = arith.constant 0 : i32
    %c0_i32_0 = arith.constant 0 : i32
    %c0_i32_1 = arith.constant 0 : i32
    return %c0_i32, %c0_i32_0 : i32, i32
  }
  func.func @transform_13(%arg0: i32) -> (i32, i32) {
    %c0_i32 = arith.constant 0 : i32
    %c0_i32_0 = arith.constant 0 : i32
    %c0_i32_1 = arith.constant 0 : i32
    return %c0_i32, %c0_i32_0 : i32, i32
  }
  func.func @transform_14(%arg0: i32) -> (i32, i32) {
    %c0_i32 = arith.constant 0 : i32
    %c0_i32_0 = arith.constant 0 : i32
    %c0_i32_1 = arith.constant 0 : i32
    return %c0_i32, %c0_i32_0 : i32, i32
  }
  func.func @transform_15(%arg0: i32) -> (i32, i32) {
    %c0_i32 = arith.constant 0 : i32
    %c0_i32_0 = arith.constant 0 : i32
    %c0_i32_1 = arith.constant 0 : i32
    return %c0_i32, %c0_i32_0 : i32, i32
  }
  func.func @transform_16(%arg0: i32) -> (i32, i32) {
    %c0_i32 = arith.constant 0 : i32
    %c0_i32_0 = arith.constant 0 : i32
    %c0_i32_1 = arith.constant 0 : i32
    return %c0_i32, %c0_i32_0 : i32, i32
  }
  func.func @transform_17(%arg0: i32) -> (i32, i32) {
    %c0_i32 = arith.constant 0 : i32
    %c0_i32_0 = arith.constant 0 : i32
    %c0_i32_1 = arith.constant 0 : i32
    return %c0_i32, %c0_i32_0 : i32, i32
  }
  func.func @transform_18(%arg0: i32) -> (i32, i32) {
    %c0_i32 = arith.constant 0 : i32
    %c0_i32_0 = arith.constant 0 : i32
    %c0_i32_1 = arith.constant 0 : i32
    return %c0_i32, %c0_i32_0 : i32, i32
  }
  func.func @transform_19(%arg0: i32) -> (i32, i32, i32) {
    %c0_i32 = arith.constant 0 : i32
    %c0_i32_0 = arith.constant 0 : i32
    %c0_i32_1 = arith.constant 0 : i32
    return %arg0, %c0_i32, %c0_i32_0 : i32, i32, i32
  }
}

</mosaic_0001>

<llo_original>
// kernel: _forward_jit.2
$region0: #{_forward_jit.2}
  #allocation0 [shape = 'u32[]', space=smem, size = 0x4, offset = 0x4, fixed_abs, tag = 'smem constant byte address 0x4 - core index']
  #allocation1 [shape = 'u32[72,128]{1,0:T(1,128)}', space=vmem, size = 0x9000, scoped, tag = 'internal scratch']
  %s0 = inlined_call_operand.vmem [shape: f32[2,3,256], index: 0, kind: input, shape index: {}]
  %s1 = inlined_call_operand.vmem [shape: f32[3,4], index: 1, kind: input, shape index: {}]
  %s2 = inlined_call_operand.vmem [shape: f32[4], index: 2, kind: input, shape index: {}]
  %s3 = inlined_call_operand.vmem [shape: s32[2,1,256], index: 3, kind: output, shape index: {}]
  %s4 = sld [smem:[#allocation0]]
  $region53: #{_forward_jit.2} parent=0
    _
  %s6 = ssub.s32 1, %s4
  %s7 = scalar_select 0, %s6, %s4
  $region1: #{_forward_jit.2} parent=0
    #allocation2 [shape = 'u8[2048]{0}', space=smem, size = 0x800, scoped, tag = 'input window, operand 1, single buffered']
    #allocation3 [shape = 's32[2]{0}', space=sflag, size = 0x8, scoped, tag = 'scoped memory for _forward_jit.2']
    #allocation4 [shape = 'u8[512]{0}', space=smem, size = 0x200, scoped, tag = 'input window, operand 2, single buffered']
    #allocation5 [shape = 's32[1]{0}', space=sflag, size = 0x4, scoped, tag = 'scoped memory for _forward_jit.2']
    %8 = vsyncpa [#allocation3], 0
    %9 = vsyncpa [#allocation5], 0
    loop: start=0, step=1, limit=4
    $region2: #{_forward_jit.2} parent=1 // loop_pre_header
      _
    $region3: #{_forward_jit.2} parent=1 // loop_header
      %s11 = sphi 0, %s15
      %p12 = scmp.ge.s32.totalorder %s11, 4
      %s21 = sphi 0, %s23
      %s24 = sphi 0, %s21
      %s25 = sphi 0, %s24
      %s41 = sphi 0, %s25
      %s45 = sphi 0, %s45
      %s47 = sphi 0, %s45
      %s48 = sphi 0, %s47
      %s62 = sphi 0, %s48
      %s66 = sphi 0, %s66
      %s68 = sphi 0, %s66
      %s69 = sphi 0, %s68
      %s83 = sphi 0, %s69
      %s89 = sphi 0, %s91
      %s92 = sphi 0, %s89
      %s93 = sphi 0, %s92
      %s109 = sphi 0, %s93
    $region4: #{_forward_jit.2} parent=1 // loop_header_branch
      %14 = sbr.rel (%p12) target = $region8
    $region5: #{_forward_jit.2} parent=1 // loop_body
      %s16 = ssub.s32 %s11, 1
      %s17 = ssub.s32 %s11, 2
      %s18 = sadd.s32 %s11, 1
      %s19 = ssub.s32 %s11, %s18
      %p20 = scmp.eq.s32.totalorder %s19, 0
      %s22 = sadd.s32 %s21, 1
      %s23 = scalar_select %p20, %s21, %s22
      %p26 = pneg %p20
      %p27 = scmp.eq.s32.totalorder %s11, 1
      %p28 = por %p26, %p27
      %p29 = scmp.ne.s32.totalorder %s21, %s24
      %p30 = scmp.eq.s32.totalorder %s11, 0
      %p31 = por %p29, %p30
      %p32 = scmp.ne.s32.totalorder %s21, %s24
      %p33 = scmp.eq.s32.totalorder %s16, 1
      %p34 = por %p32, %p33
      %p35 = scmp.ne.s32.totalorder %s24, %s25
      %p36 = scmp.eq.s32.totalorder %s16, 0
      %p37 = por %p35, %p36
      %p38 = scmp.ne.s32.totalorder %s24, %s25
      %p39 = scmp.eq.s32.totalorder %s17, 1
      %p40 = por %p38, %p39
      %p42 = scmp.ne.s32.totalorder %s25, %s41
      %p43 = scmp.eq.s32.totalorder %s17, 0
      %p44 = por %p42, %p43
      %s46 = sadd.s32 %s45, 1
      %p49 = scmp.eq.s32.totalorder %s11, 1
      %p50 = scmp.ne.s32.totalorder %s45, %s47
      %p51 = scmp.eq.s32.totalorder %s11, 0
      %p52 = por %p50, %p51
      %p53 = scmp.ne.s32.totalorder %s45, %s47
      %p54 = scmp.eq.s32.totalorder %s16, 1
      %p55 = por %p53, %p54
      %p56 = scmp.ne.s32.totalorder %s47, %s48
      %p57 = scmp.eq.s32.totalorder %s16, 0
      %p58 = por %p56, %p57
      %p59 = scmp.ne.s32.totalorder %s47, %s48
      %p60 = scmp.eq.s32.totalorder %s17, 1
      %p61 = por %p59, %p60
      %p63 = scmp.ne.s32.totalorder %s48, %s62
      %p64 = scmp.eq.s32.totalorder %s17, 0
      %p65 = por %p63, %p64
      %s67 = sadd.s32 %s66, 1
      %p70 = scmp.eq.s32.totalorder %s11, 1
      %p71 = scmp.ne.s32.totalorder %s66, %s68
      %p72 = scmp.eq.s32.totalorder %s11, 0
      %p73 = por %p71, %p72
      %p74 = scmp.ne.s32.totalorder %s66, %s68
      %p75 = scmp.eq.s32.totalorder %s16, 1
      %p76 = por %p74, %p75
      %p77 = scmp.ne.s32.totalorder %s68, %s69
      %p78 = scmp.eq.s32.totalorder %s16, 0
      %p79 = por %p77, %p78
      %p80 = scmp.ne.s32.totalorder %s68, %s69
      %p81 = scmp.eq.s32.totalorder %s17, 1
      %p82 = por %p80, %p81
      %p84 = scmp.ne.s32.totalorder %s69, %s83
      %p85 = scmp.eq.s32.totalorder %s17, 0
      %p86 = por %p84, %p85
      %s87 = ssub.s32 %s11, %s18
      %p88 = scmp.eq.s32.totalorder %s87, 0
      %s90 = sadd.s32 %s89, 1
      %s91 = scalar_select %p88, %s89, %s90
      %p94 = pneg %p88
      %p95 = scmp.eq.s32.totalorder %s11, 1
      %p96 = por %p94, %p95
      %p97 = scmp.ne.s32.totalorder %s89, %s92
      %p98 = scmp.eq.s32.totalorder %s11, 0
      %p99 = por %p97, %p98
      %p100 = scmp.ne.s32.totalorder %s89, %s92
      %p101 = scmp.eq.s32.totalorder %s16, 1
      %p102 = por %p100, %p101
      %p103 = scmp.ne.s32.totalorder %s92, %s93
      %p104 = scmp.eq.s32.totalorder %s16, 0
      %p105 = por %p103, %p104
      %p106 = scmp.ne.s32.totalorder %s92, %s93
      %p107 = scmp.eq.s32.totalorder %s17, 1
      %p108 = por %p106, %p107
      %p110 = scmp.ne.s32.totalorder %s93, %s109
      %p111 = scmp.eq.s32.totalorder %s17, 0
      %p112 = por %p110, %p111
      %p113 = scmp.le.s32.totalorder 1, %s11
      %p114 = scmp.lt.s32.totalorder %s11, 3
      %p115 = pnand %p113, %p114
      %p116 = pneg %p115
      // Predicated region
      $region9: #{_forward_jit.2} parent=5 // pred_check
        _
      $region10: #{_forward_jit.2} parent=5 // pred_check_branch
        %118 = sbr.rel (%p115) target = $region12
      $region11: #{_forward_jit.2} parent=5 // pred_region
        %s119 = ssub.s32 %s11, 1
        // Predicated region
        $region13: #{_forward_jit.2} parent=11 // pred_check
          %p120 = pneg %p58
        $region14: #{_forward_jit.2} parent=11 // pred_check_branch
          %122 = sbr.rel (%p120) target = $region16
        $region15: #{_forward_jit.2} parent=11 // pred_region
          %124 = vsyncadd [#allocation3], 0
          %s126 = sshll.u32 %s1, 4
          %s127 = int_to_ptr.vmem [resolvable:$true] %s126
          %129 = dma.vmem_to_smem %s127, 64, [#allocation2], [#allocation3]
        $region16: #{_forward_jit.2} parent=11 // pred_fallthru
          _
        // Predicated region
        $region17: #{_forward_jit.2} parent=11 // pred_check
          %p130 = pneg %p79
        $region18: #{_forward_jit.2} parent=11 // pred_check_branch
          %132 = sbr.rel (%p130) target = $region20
        $region19: #{_forward_jit.2} parent=11 // pred_region
          %134 = vsyncadd [#allocation5], 0
          %s136 = sshll.u32 %s2, 4
          %s137 = int_to_ptr.vmem [resolvable:$true] %s136
          %139 = dma.vmem_to_smem %s137, 16, [#allocation4], [#allocation5]
        $region20: #{_forward_jit.2} parent=11 // pred_fallthru
          _
      $region12: #{_forward_jit.2} parent=5 // pred_fallthru
        _
      %p140 = scmp.lt.s32.totalorder %s11, 2
      // Predicated region
      $region21: #{_forward_jit.2} parent=5 // pred_check
        %p141 = pneg %p140
      $region22: #{_forward_jit.2} parent=5 // pred_check_branch
        %143 = sbr.rel (%p141) target = $region24
      $region23: #{_forward_jit.2} parent=5 // pred_region
        // Predicated region
        $region25: #{_forward_jit.2} parent=23 // pred_check
          %p144 = pneg %p31
        $region26: #{_forward_jit.2} parent=23 // pred_check_branch
          %146 = sbr.rel (%p144) target = $region28
        $region27: #{_forward_jit.2} parent=23 // pred_region
          %p147 = scmp.lt.s32.totalorder %s11, 1
          %s148 = scalar_select %p147, %s11, 1
          %s149 = smul.addr %s148, 2
          %s150 = smul.addr %s149, 4
          %s151 = scalar_lea.vmem %s0, %s150
        $region28: #{_forward_jit.2} parent=23 // pred_fallthru
          _
      $region24: #{_forward_jit.2} parent=5 // pred_fallthru
        _
      %p152 = scmp.le.s32.totalorder 1, %s11
      %p153 = scmp.lt.s32.totalorder %s11, 3
      %p154 = pnand %p152, %p153
      %p155 = pneg %p154
      // Predicated region
      $region29: #{_forward_jit.2} parent=5 // pred_check
        _
      $region30: #{_forward_jit.2} parent=5 // pred_check_branch
        %157 = sbr.rel (%p154) target = $region32
      $region31: #{_forward_jit.2} parent=5 // pred_region
        %s158 = ssub.s32 %s11, 1
        // Predicated region
        $region33: #{_forward_jit.2} parent=31 // pred_check
          %p159 = pneg %p58
        $region34: #{_forward_jit.2} parent=31 // pred_check_branch
          %161 = sbr.rel (%p159) target = $region36
        $region35: #{_forward_jit.2} parent=31 // pred_region
          %163 = dma.done [#allocation3], 64
        $region36: #{_forward_jit.2} parent=31 // pred_fallthru
          _
        // Predicated region
        $region37: #{_forward_jit.2} parent=31 // pred_check
          %p164 = pneg %p79
        $region38: #{_forward_jit.2} parent=31 // pred_check_branch
          %166 = sbr.rel (%p164) target = $region40
        $region39: #{_forward_jit.2} parent=31 // pred_region
          %168 = dma.done [#allocation5], 16
        $region40: #{_forward_jit.2} parent=31 // pred_fallthru
          _
        %169 = sfence
        %p170 = scmp.lt.s32.totalorder %s16, 1
        %s171 = scalar_select %p170, %s16, 1
        %s172 = smul.addr %s171, 2
        %s173 = smul.addr %s172, 4
        %s174 = scalar_lea.vmem %s0, %s173
        %p175 = pneg %p37
        %p176 = pneg %p34
        %p177 = pneg %p58
        %p178 = pneg %p55
        %p179 = pneg %p79
        %p180 = pneg %p76
        %p181 = pneg %p105
        %p182 = pneg %p102
        %p183 = scmp.lt.s32.totalorder %s16, 1
        %s184 = scalar_select %p183, %s16, 1
        %s185 = smul.addr %s184, 2
        %s186 = scalar_lea.vmem %s3, %s185
        %p187 = scmp.lt.s32.totalorder %s16, 1
        %s188 = scalar_select %p187, %s16, 1
        %s189 = smul.addr %s188, 2
        %s190 = smul.addr %s189, 4
        %s191 = scalar_lea.vmem %s0, %s190
        %p192 = scmp.lt.s32.totalorder %s16, 1
        %s193 = scalar_select %p192, %s16, 1
        %s194 = smul.addr %s193, 2
        %s195 = scalar_lea.vmem %s3, %s194
        %v196 = vld [vmem:[%s191] sm:$0x77]
        %s197 = sld [smem:[#allocation2]]
        %v198 = vstv %s197
        %v199 = vmul.f32 %v196, %v198
        %s200 = sld [smem:[#allocation4]]
        %v201 = vstv %s200
        %v202 = vadd.f32 %v199, %v201
        %s203 = sld [smem:[#allocation2 + $0x80]]
        %v204 = vstv %s203
        %v205 = vmul.f32 %v196, %v204
        %v207 = vrot.slane %v205, 5
        %v208 = vrot.slane %v207, 4
        %v210 = vadd.f32 %v202, %v208
        %s211 = sld [smem:[#allocation2 + $0x100]]
        %v212 = vstv %s211
        %v213 = vmul.f32 %v196, %v212
        %v215 = vrot.slane %v213, 6
        %v216 = vrot.slane %v215, 4
        %v218 = vadd.f32 %v210, %v216
        %s219 = sld [smem:[#allocation2 + $0x1]]
        %v220 = vstv %s219
        %v221 = vmul.f32 %v196, %v220
        %s222 = sld [smem:[#allocation4 + $0x1]]
        %v223 = vstv %s222
        %v224 = vadd.f32 %v221, %v223
        %s225 = sld [smem:[#allocation2 + $0x81]]
        %v226 = vstv %s225
        %v227 = vmul.f32 %v196, %v226
        %v229 = vrot.slane %v227, 5
        %v230 = vrot.slane %v229, 4
        %v232 = vadd.f32 %v224, %v230
        %s233 = sld [smem:[#allocation2 + $0x101]]
        %v234 = vstv %s233
        %v235 = vmul.f32 %v196, %v234
        %v237 = vrot.slane %v235, 6
        %v238 = vrot.slane %v237, 4
        %v240 = vadd.f32 %v232, %v238
        %vm241 = vcmp.gt.f32.partialorder %v240, %v218
        %v242 = vsel %vm241, %v240, %v218
        %v243 = vsel %vm241, 1, 0
        %s244 = sld [smem:[#allocation2 + $0x2]]
        %v245 = vstv %s244
        %v246 = vmul.f32 %v196, %v245
        %s247 = sld [smem:[#allocation4 + $0x2]]
        %v248 = vstv %s247
        %v249 = vadd.f32 %v246, %v248
        %s250 = sld [smem:[#allocation2 + $0x82]]
        %v251 = vstv %s250
        %v252 = vmul.f32 %v196, %v251
        %v254 = vrot.slane %v252, 5
        %v255 = vrot.slane %v254, 4
        %v257 = vadd.f32 %v249, %v255
        %s258 = sld [smem:[#allocation2 + $0x102]]
        %v259 = vstv %s258
        %v260 = vmul.f32 %v196, %v259
        %v262 = vrot.slane %v260, 6
        %v263 = vrot.slane %v262, 4
        %v265 = vadd.f32 %v257, %v263
        %vm266 = vcmp.gt.f32.partialorder %v265, %v242
        %v267 = vsel %vm266, %v265, %v242
        %v268 = vsel %vm266, 2, %v243
        %s269 = sld [smem:[#allocation2 + $0x3]]
        %v270 = vstv %s269
        %v271 = vmul.f32 %v196, %v270
        %s272 = sld [smem:[#allocation4 + $0x3]]
        %v273 = vstv %s272
        %v274 = vadd.f32 %v271, %v273
        %s275 = sld [smem:[#allocation2 + $0x83]]
        %v276 = vstv %s275
        %v277 = vmul.f32 %v196, %v276
        %v279 = vrot.slane %v277, 5
        %v280 = vrot.slane %v279, 4
        %v282 = vadd.f32 %v274, %v280
        %s283 = sld [smem:[#allocation2 + $0x103]]
        %v284 = vstv %s283
        %v285 = vmul.f32 %v196, %v284
        %v287 = vrot.slane %v285, 6
        %v288 = vrot.slane %v287, 4
        %v290 = vadd.f32 %v282, %v288
        %vm291 = vcmp.gt.f32.partialorder %v290, %v267
        %v292 = vsel %vm291, 3, %v268
        %v293 = vrot.slane %v292, 3
        %vm294 = vcmask 1040384
        %v295 = vsel %vm294, %v292, %v293
        %v296 = vlaneseq
        %vm297 = vcmp.ge.s32.totalorder %v296, 0
        %vm298 = vcmp.lt.s32.totalorder %v296, 256
        %vm299 = vmand %vm297, %vm298
        %300 = vst.msk [vmem:[%s195] sm:$0x3] %vm299, %v295
        %p301 = scmp.lt.s32.totalorder %s16, 1
        %s302 = scalar_select %p301, %s16, 1
        %s303 = smul.addr %s302, 2
        %s304 = scalar_lea.vmem %s3, %s303
        // Predicated region
        $region41: #{_forward_jit.2} parent=31 // pred_check
          %p305 = pneg %p102
        $region42: #{_forward_jit.2} parent=31 // pred_check_branch
          %307 = sbr.rel (%p305) target = $region44
        $region43: #{_forward_jit.2} parent=31 // pred_region
          _
        $region44: #{_forward_jit.2} parent=31 // pred_fallthru
          _
      $region32: #{_forward_jit.2} parent=5 // pred_fallthru
        _
      %p308 = scmp.le.s32.totalorder 2, %s11
      // Predicated region
      $region45: #{_forward_jit.2} parent=5 // pred_check
        %p309 = pneg %p308
      $region46: #{_forward_jit.2} parent=5 // pred_check_branch
        %311 = sbr.rel (%p309) target = $region48
      $region47: #{_forward_jit.2} parent=5 // pred_region
        %s312 = ssub.s32 %s11, 2
        // Predicated region
        $region49: #{_forward_jit.2} parent=47 // pred_check
          %p313 = pneg %p108
        $region50: #{_forward_jit.2} parent=47 // pred_check_branch
          %315 = sbr.rel (%p313) target = $region52
        $region51: #{_forward_jit.2} parent=47 // pred_region
          %p316 = scmp.lt.s32.totalorder %s17, 1
          %s317 = scalar_select %p316, %s17, 1
          %s318 = smul.addr %s317, 2
          %s319 = scalar_lea.vmem %s3, %s318
        $region52: #{_forward_jit.2} parent=47 // pred_fallthru
          _
      $region48: #{_forward_jit.2} parent=5 // pred_fallthru
        _
    $region6: #{_forward_jit.2} parent=1 // loop_footer
      %s15 = sadd.s32 1, %s11
    $region7: #{_forward_jit.2} parent=1 // loop_footer_branch
      %10 = sbr.rel target = $region3
    $region8: #{_forward_jit.2} parent=1 // loop_exit
      _
    %320 = vsyncpa [#allocation3], 1
    %s321 = scalar_lea.sflag [#allocation3], 1
    %322 = vsyncpa %s321, 1
    %323 = vsyncpa [#allocation5], 1

// kernel: _forward_jit.3
$region0: #{_forward_jit.3}
  #allocation0 [shape = 'u32[]', space=smem, size = 0x4, offset = 0x4, fixed_abs, tag = 'smem constant byte address 0x4 - core index']
  #allocation1 [shape = 'u32[72,128]{1,0:T(1,128)}', space=vmem, size = 0x9000, scoped, tag = 'internal scratch']
  %s0 = inlined_call_operand.vmem [shape: f32[2,16,48], index: 0, kind: input, shape index: {}]
  %s1 = inlined_call_operand.vmem [shape: f32[1,32], index: 1, kind: input, shape index: {}]
  %s2 = inlined_call_operand.vmem [shape: f32[17,32], index: 2, kind: input, shape index: {}]
  %s3 = inlined_call_operand.vmem [shape: f32[48,32], index: 3, kind: input, shape index: {}]
  %s4 = inlined_call_operand.vmem [shape: f32[1,32], index: 4, kind: input, shape index: {}]
  %s5 = inlined_call_operand.vmem [shape: f32[1,32], index: 5, kind: input, shape index: {}]
  %s6 = inlined_call_operand.vmem [shape: f32[1,32], index: 6, kind: input, shape index: {}]
  %s7 = inlined_call_operand.vmem [shape: f32[32,96], index: 7, kind: input, shape index: {}]
  %s8 = inlined_call_operand.vmem [shape: f32[1,96], index: 8, kind: input, shape index: {}]
  %s9 = inlined_call_operand.vmem [shape: f32[32,32], index: 9, kind: input, shape index: {}]
  %s10 = inlined_call_operand.vmem [shape: f32[1,32], index: 10, kind: input, shape index: {}]
  %s11 = inlined_call_operand.vmem [shape: f32[1,32], index: 11, kind: input, shape index: {}]
  %s12 = inlined_call_operand.vmem [shape: f32[1,32], index: 12, kind: input, shape index: {}]
  %s13 = inlined_call_operand.vmem [shape: f32[32,128], index: 13, kind: input, shape index: {}]
  %s14 = inlined_call_operand.vmem [shape: f32[1,128], index: 14, kind: input, shape index: {}]
  %s15 = inlined_call_operand.vmem [shape: f32[128,32], index: 15, kind: input, shape index: {}]
  %s16 = inlined_call_operand.vmem [shape: f32[1,32], index: 16, kind: input, shape index: {}]
  %s17 = inlined_call_operand.vmem [shape: f32[1,32], index: 17, kind: input, shape index: {}]
  %s18 = inlined_call_operand.vmem [shape: f32[1,32], index: 18, kind: input, shape index: {}]
  %s19 = inlined_call_operand.vmem [shape: f32[2,17,32], index: 19, kind: output, shape index: {}]
  %s20 = sld [smem:[#allocation0]]
  $region109: #{_forward_jit.3} parent=0
    _
  %s22 = ssub.s32 1, %s20
  %s23 = scalar_select 0, %s22, %s20
  loop: start=0, step=1, limit=4
  $region2: #{_forward_jit.3} parent=0 // loop_pre_header
    _
  $region3: #{_forward_jit.3} parent=0 // loop_header
    %s25 = sphi 0, %s29
    %p26 = scmp.ge.s32.totalorder %s25, 4
    %s35 = sphi 0, %s37
    %s38 = sphi 0, %s35
    %s39 = sphi 0, %s38
    %s55 = sphi 0, %s39
    %s59 = sphi 0, %s59
    %s61 = sphi 0, %s59
    %s62 = sphi 0, %s61
    %s76 = sphi 0, %s62
    %s80 = sphi 0, %s80
    %s82 = sphi 0, %s80
    %s83 = sphi 0, %s82
    %s97 = sphi 0, %s83
    %s101 = sphi 0, %s101
    %s103 = sphi 0, %s101
    %s104 = sphi 0, %s103
    %s118 = sphi 0, %s104
    %s122 = sphi 0, %s122
    %s124 = sphi 0, %s122
    %s125 = sphi 0, %s124
    %s139 = sphi 0, %s125
    %s143 = sphi 0, %s143
    %s145 = sphi 0, %s143
    %s146 = sphi 0, %s145
    %s160 = sphi 0, %s146
    %s164 = sphi 0, %s164
    %s166 = sphi 0, %s164
    %s167 = sphi 0, %s166
    %s181 = sphi 0, %s167
    %s185 = sphi 0, %s185
    %s187 = sphi 0, %s185
    %s188 = sphi 0, %s187
    %s202 = sphi 0, %s188
    %s206 = sphi 0, %s206
    %s208 = sphi 0, %s206
    %s209 = sphi 0, %s208
    %s223 = sphi 0, %s209
    %s227 = sphi 0, %s227
    %s229 = sphi 0, %s227
    %s230 = sphi 0, %s229
    %s244 = sphi 0, %s230
    %s248 = sphi 0, %s248
    %s250 = sphi 0, %s248
    %s251 = sphi 0, %s250
    %s265 = sphi 0, %s251
    %s269 = sphi 0, %s269
    %s271 = sphi 0, %s269
    %s272 = sphi 0, %s271
    %s286 = sphi 0, %s272
    %s290 = sphi 0, %s290
    %s292 = sphi 0, %s290
    %s293 = sphi 0, %s292
    %s307 = sphi 0, %s293
    %s311 = sphi 0, %s311
    %s313 = sphi 0, %s311
    %s314 = sphi 0, %s313
    %s328 = sphi 0, %s314
    %s332 = sphi 0, %s332
    %s334 = sphi 0, %s332
    %s335 = sphi 0, %s334
    %s349 = sphi 0, %s335
    %s353 = sphi 0, %s353
    %s355 = sphi 0, %s353
    %s356 = sphi 0, %s355
    %s370 = sphi 0, %s356
    %s374 = sphi 0, %s374
    %s376 = sphi 0, %s374
    %s377 = sphi 0, %s376
    %s391 = sphi 0, %s377
    %s395 = sphi 0, %s395
    %s397 = sphi 0, %s395
    %s398 = sphi 0, %s397
    %s412 = sphi 0, %s398
    %s416 = sphi 0, %s416
    %s418 = sphi 0, %s416
    %s419 = sphi 0, %s418
    %s433 = sphi 0, %s419
    %s439 = sphi 0, %s441
    %s442 = sphi 0, %s439
    %s443 = sphi 0, %s442
    %s459 = sphi 0, %s443
  $region4: #{_forward_jit.3} parent=0 // loop_header_branch
    %28 = sbr.rel (%p26) target = $region8
  $region5: #{_forward_jit.3} parent=0 // loop_body
    %s30 = ssub.s32 %s25, 1
    %s31 = ssub.s32 %s25, 2
    %s32 = sadd.s32 %s25, 1
    %s33 = ssub.s32 %s25, %s32
    %p34 = scmp.eq.s32.totalorder %s33, 0
    %s36 = sadd.s32 %s35, 1
    %s37 = scalar_select %p34, %s35, %s36
    %p40 = pneg %p34
    %p41 = scmp.eq.s32.totalorder %s25, 1
    %p42 = por %p40, %p41
    %p43 = scmp.ne.s32.totalorder %s35, %s38
    %p44 = scmp.eq.s32.totalorder %s25, 0
    %p45 = por %p43, %p44
    %p46 = scmp.ne.s32.totalorder %s35, %s38
    %p47 = scmp.eq.s32.totalorder %s30, 1
    %p48 = por %p46, %p47
    %p49 = scmp.ne.s32.totalorder %s38, %s39
    %p50 = scmp.eq.s32.totalorder %s30, 0
    %p51 = por %p49, %p50
    %p52 = scmp.ne.s32.totalorder %s38, %s39
    %p53 = scmp.eq.s32.totalorder %s31, 1
    %p54 = por %p52, %p53
    %p56 = scmp.ne.s32.totalorder %s39, %s55
    %p57 = scmp.eq.s32.totalorder %s31, 0
    %p58 = por %p56, %p57
    %s60 = sadd.s32 %s59, 1
    %p63 = scmp.eq.s32.totalorder %s25, 1
    %p64 = scmp.ne.s32.totalorder %s59, %s61
    %p65 = scmp.eq.s32.totalorder %s25, 0
    %p66 = por %p64, %p65
    %p67 = scmp.ne.s32.totalorder %s59, %s61
    %p68 = scmp.eq.s32.totalorder %s30, 1
    %p69 = por %p67, %p68
    %p70 = scmp.ne.s32.totalorder %s61, %s62
    %p71 = scmp.eq.s32.totalorder %s30, 0
    %p72 = por %p70, %p71
    %p73 = scmp.ne.s32.totalorder %s61, %s62
    %p74 = scmp.eq.s32.totalorder %s31, 1
    %p75 = por %p73, %p74
    %p77 = scmp.ne.s32.totalorder %s62, %s76
    %p78 = scmp.eq.s32.totalorder %s31, 0
    %p79 = por %p77, %p78
    %s81 = sadd.s32 %s80, 1
    %p84 = scmp.eq.s32.totalorder %s25, 1
    %p85 = scmp.ne.s32.totalorder %s80, %s82
    %p86 = scmp.eq.s32.totalorder %s25, 0
    %p87 = por %p85, %p86
    %p88 = scmp.ne.s32.totalorder %s80, %s82
    %p89 = scmp.eq.s32.totalorder %s30, 1
    %p90 = por %p88, %p89
    %p91 = scmp.ne.s32.totalorder %s82, %s83
    %p92 = scmp.eq.s32.totalorder %s30, 0
    %p93 = por %p91, %p92
    %p94 = scmp.ne.s32.totalorder %s82, %s83
    %p95 = scmp.eq.s32.totalorder %s31, 1
    %p96 = por %p94, %p95
    %p98 = scmp.ne.s32.totalorder %s83, %s97
    %p99 = scmp.eq.s32.totalorder %s31, 0
    %p100 = por %p98, %p99
    %s102 = sadd.s32 %s101, 1
    %p105 = scmp.eq.s32.totalorder %s25, 1
    %p106 = scmp.ne.s32.totalorder %s101, %s103
    %p107 = scmp.eq.s32.totalorder %s25, 0
    %p108 = por %p106, %p107
    %p109 = scmp.ne.s32.totalorder %s101, %s103
    %p110 = scmp.eq.s32.totalorder %s30, 1
    %p111 = por %p109, %p110
    %p112 = scmp.ne.s32.totalorder %s103, %s104
    %p113 = scmp.eq.s32.totalorder %s30, 0
    %p114 = por %p112, %p113
    %p115 = scmp.ne.s32.totalorder %s103, %s104
    %p116 = scmp.eq.s32.totalorder %s31, 1
    %p117 = por %p115, %p116
    %p119 = scmp.ne.s32.totalorder %s104, %s118
    %p120 = scmp.eq.s32.totalorder %s31, 0
    %p121 = por %p119, %p120
    %s123 = sadd.s32 %s122, 1
    %p126 = scmp.eq.s32.totalorder %s25, 1
    %p127 = scmp.ne.s32.totalorder %s122, %s124
    %p128 = scmp.eq.s32.totalorder %s25, 0
    %p129 = por %p127, %p128
    %p130 = scmp.ne.s32.totalorder %s122, %s124
    %p131 = scmp.eq.s32.totalorder %s30, 1
    %p132 = por %p130, %p131
    %p133 = scmp.ne.s32.totalorder %s124, %s125
    %p134 = scmp.eq.s32.totalorder %s30, 0
    %p135 = por %p133, %p134
    %p136 = scmp.ne.s32.totalorder %s124, %s125
    %p137 = scmp.eq.s32.totalorder %s31, 1
    %p138 = por %p136, %p137
    %p140 = scmp.ne.s32.totalorder %s125, %s139
    %p141 = scmp.eq.s32.totalorder %s31, 0
    %p142 = por %p140, %p141
    %s144 = sadd.s32 %s143, 1
    %p147 = scmp.eq.s32.totalorder %s25, 1
    %p148 = scmp.ne.s32.totalorder %s143, %s145
    %p149 = scmp.eq.s32.totalorder %s25, 0
    %p150 = por %p148, %p149
    %p151 = scmp.ne.s32.totalorder %s143, %s145
    %p152 = scmp.eq.s32.totalorder %s30, 1
    %p153 = por %p151, %p152
    %p154 = scmp.ne.s32.totalorder %s145, %s146
    %p155 = scmp.eq.s32.totalorder %s30, 0
    %p156 = por %p154, %p155
    %p157 = scmp.ne.s32.totalorder %s145, %s146
    %p158 = scmp.eq.s32.totalorder %s31, 1
    %p159 = por %p157, %p158
    %p161 = scmp.ne.s32.totalorder %s146, %s160
    %p162 = scmp.eq.s32.totalorder %s31, 0
    %p163 = por %p161, %p162
    %s165 = sadd.s32 %s164, 1
    %p168 = scmp.eq.s32.totalorder %s25, 1
    %p169 = scmp.ne.s32.totalorder %s164, %s166
    %p170 = scmp.eq.s32.totalorder %s25, 0
    %p171 = por %p169, %p170
    %p172 = scmp.ne.s32.totalorder %s164, %s166
    %p173 = scmp.eq.s32.totalorder %s30, 1
    %p174 = por %p172, %p173
    %p175 = scmp.ne.s32.totalorder %s166, %s167
    %p176 = scmp.eq.s32.totalorder %s30, 0
    %p177 = por %p175, %p176
    %p178 = scmp.ne.s32.totalorder %s166, %s167
    %p179 = scmp.eq.s32.totalorder %s31, 1
    %p180 = por %p178, %p179
    %p182 = scmp.ne.s32.totalorder %s167, %s181
    %p183 = scmp.eq.s32.totalorder %s31, 0
    %p184 = por %p182, %p183
    %s186 = sadd.s32 %s185, 1
    %p189 = scmp.eq.s32.totalorder %s25, 1
    %p190 = scmp.ne.s32.totalorder %s185, %s187
    %p191 = scmp.eq.s32.totalorder %s25, 0
    %p192 = por %p190, %p191
    %p193 = scmp.ne.s32.totalorder %s185, %s187
    %p194 = scmp.eq.s32.totalorder %s30, 1
    %p195 = por %p193, %p194
    %p196 = scmp.ne.s32.totalorder %s187, %s188
    %p197 = scmp.eq.s32.totalorder %s30, 0
    %p198 = por %p196, %p197
    %p199 = scmp.ne.s32.totalorder %s187, %s188
    %p200 = scmp.eq.s32.totalorder %s31, 1
    %p201 = por %p199, %p200
    %p203 = scmp.ne.s32.totalorder %s188, %s202
    %p204 = scmp.eq.s32.totalorder %s31, 0
    %p205 = por %p203, %p204
    %s207 = sadd.s32 %s206, 1
    %p210 = scmp.eq.s32.totalorder %s25, 1
    %p211 = scmp.ne.s32.totalorder %s206, %s208
    %p212 = scmp.eq.s32.totalorder %s25, 0
    %p213 = por %p211, %p212
    %p214 = scmp.ne.s32.totalorder %s206, %s208
    %p215 = scmp.eq.s32.totalorder %s30, 1
    %p216 = por %p214, %p215
    %p217 = scmp.ne.s32.totalorder %s208, %s209
    %p218 = scmp.eq.s32.totalorder %s30, 0
    %p219 = por %p217, %p218
    %p220 = scmp.ne.s32.totalorder %s208, %s209
    %p221 = scmp.eq.s32.totalorder %s31, 1
    %p222 = por %p220, %p221
    %p224 = scmp.ne.s32.totalorder %s209, %s223
    %p225 = scmp.eq.s32.totalorder %s31, 0
    %p226 = por %p224, %p225
    %s228 = sadd.s32 %s227, 1
    %p231 = scmp.eq.s32.totalorder %s25, 1
    %p232 = scmp.ne.s32.totalorder %s227, %s229
    %p233 = scmp.eq.s32.totalorder %s25, 0
    %p234 = por %p232, %p233
    %p235 = scmp.ne.s32.totalorder %s227, %s229
    %p236 = scmp.eq.s32.totalorder %s30, 1
    %p237 = por %p235, %p236
    %p238 = scmp.ne.s32.totalorder %s229, %s230
    %p239 = scmp.eq.s32.totalorder %s30, 0
    %p240 = por %p238, %p239
    %p241 = scmp.ne.s32.totalorder %s229, %s230
    %p242 = scmp.eq.s32.totalorder %s31, 1
    %p243 = por %p241, %p242
    %p245 = scmp.ne.s32.totalorder %s230, %s244
    %p246 = scmp.eq.s32.totalorder %s31, 0
    %p247 = por %p245, %p246
    %s249 = sadd.s32 %s248, 1
    %p252 = scmp.eq.s32.totalorder %s25, 1
    %p253 = scmp.ne.s32.totalorder %s248, %s250
    %p254 = scmp.eq.s32.totalorder %s25, 0
    %p255 = por %p253, %p254
    %p256 = scmp.ne.s32.totalorder %s248, %s250
    %p257 = scmp.eq.s32.totalorder %s30, 1
    %p258 = por %p256, %p257
    %p259 = scmp.ne.s32.totalorder %s250, %s251
    %p260 = scmp.eq.s32.totalorder %s30, 0
    %p261 = por %p259, %p260
    %p262 = scmp.ne.s32.totalorder %s250, %s251
    %p263 = scmp.eq.s32.totalorder %s31, 1
    %p264 = por %p262, %p263
    %p266 = scmp.ne.s32.totalorder %s251, %s265
    %p267 = scmp.eq.s32.totalorder %s31, 0
    %p268 = por %p266, %p267
    %s270 = sadd.s32 %s269, 1
    %p273 = scmp.eq.s32.totalorder %s25, 1
    %p274 = scmp.ne.s32.totalorder %s269, %s271
    %p275 = scmp.eq.s32.totalorder %s25, 0
    %p276 = por %p274, %p275
    %p277 = scmp.ne.s32.totalorder %s269, %s271
    %p278 = scmp.eq.s32.totalorder %s30, 1
    %p279 = por %p277, %p278
    %p280 = scmp.ne.s32.totalorder %s271, %s272
    %p281 = scmp.eq.s32.totalorder %s30, 0
    %p282 = por %p280, %p281
    %p283 = scmp.ne.s32.totalorder %s271, %s272
    %p284 = scmp.eq.s32.totalorder %s31, 1
    %p285 = por %p283, %p284
    %p287 = scmp.ne.s32.totalorder %s272, %s286
    %p288 = scmp.eq.s32.totalorder %s31, 0
    %p289 = por %p287, %p288
    %s291 = sadd.s32 %s290, 1
    %p294 = scmp.eq.s32.totalorder %s25, 1
    %p295 = scmp.ne.s32.totalorder %s290, %s292
    %p296 = scmp.eq.s32.totalorder %s25, 0
    %p297 = por %p295, %p296
    %p298 = scmp.ne.s32.totalorder %s290, %s292
    %p299 = scmp.eq.s32.totalorder %s30, 1
    %p300 = por %p298, %p299
    %p301 = scmp.ne.s32.totalorder %s292, %s293
    %p302 = scmp.eq.s32.totalorder %s30, 0
    %p303 = por %p301, %p302
    %p304 = scmp.ne.s32.totalorder %s292, %s293
    %p305 = scmp.eq.s32.totalorder %s31, 1
    %p306 = por %p304, %p305
    %p308 = scmp.ne.s32.totalorder %s293, %s307
    %p309 = scmp.eq.s32.totalorder %s31, 0
    %p310 = por %p308, %p309
    %s312 = sadd.s32 %s311, 1
    %p315 = scmp.eq.s32.totalorder %s25, 1
    %p316 = scmp.ne.s32.totalorder %s311, %s313
    %p317 = scmp.eq.s32.totalorder %s25, 0
    %p318 = por %p316, %p317
    %p319 = scmp.ne.s32.totalorder %s311, %s313
    %p320 = scmp.eq.s32.totalorder %s30, 1
    %p321 = por %p319, %p320
    %p322 = scmp.ne.s32.totalorder %s313, %s314
    %p323 = scmp.eq.s32.totalorder %s30, 0
    %p324 = por %p322, %p323
    %p325 = scmp.ne.s32.totalorder %s313, %s314
    %p326 = scmp.eq.s32.totalorder %s31, 1
    %p327 = por %p325, %p326
    %p329 = scmp.ne.s32.totalorder %s314, %s328
    %p330 = scmp.eq.s32.totalorder %s31, 0
    %p331 = por %p329, %p330
    %s333 = sadd.s32 %s332, 1
    %p336 = scmp.eq.s32.totalorder %s25, 1
    %p337 = scmp.ne.s32.totalorder %s332, %s334
    %p338 = scmp.eq.s32.totalorder %s25, 0
    %p339 = por %p337, %p338
    %p340 = scmp.ne.s32.totalorder %s332, %s334
    %p341 = scmp.eq.s32.totalorder %s30, 1
    %p342 = por %p340, %p341
    %p343 = scmp.ne.s32.totalorder %s334, %s335
    %p344 = scmp.eq.s32.totalorder %s30, 0
    %p345 = por %p343, %p344
    %p346 = scmp.ne.s32.totalorder %s334, %s335
    %p347 = scmp.eq.s32.totalorder %s31, 1
    %p348 = por %p346, %p347
    %p350 = scmp.ne.s32.totalorder %s335, %s349
    %p351 = scmp.eq.s32.totalorder %s31, 0
    %p352 = por %p350, %p351
    %s354 = sadd.s32 %s353, 1
    %p357 = scmp.eq.s32.totalorder %s25, 1
    %p358 = scmp.ne.s32.totalorder %s353, %s355
    %p359 = scmp.eq.s32.totalorder %s25, 0
    %p360 = por %p358, %p359
    %p361 = scmp.ne.s32.totalorder %s353, %s355
    %p362 = scmp.eq.s32.totalorder %s30, 1
    %p363 = por %p361, %p362
    %p364 = scmp.ne.s32.totalorder %s355, %s356
    %p365 = scmp.eq.s32.totalorder %s30, 0
    %p366 = por %p364, %p365
    %p367 = scmp.ne.s32.totalorder %s355, %s356
    %p368 = scmp.eq.s32.totalorder %s31, 1
    %p369 = por %p367, %p368
    %p371 = scmp.ne.s32.totalorder %s356, %s370
    %p372 = scmp.eq.s32.totalorder %s31, 0
    %p373 = por %p371, %p372
    %s375 = sadd.s32 %s374, 1
    %p378 = scmp.eq.s32.totalorder %s25, 1
    %p379 = scmp.ne.s32.totalorder %s374, %s376
    %p380 = scmp.eq.s32.totalorder %s25, 0
    %p381 = por %p379, %p380
    %p382 = scmp.ne.s32.totalorder %s374, %s376
    %p383 = scmp.eq.s32.totalorder %s30, 1
    %p384 = por %p382, %p383
    %p385 = scmp.ne.s32.totalorder %s376, %s377
    %p386 = scmp.eq.s32.totalorder %s30, 0
    %p387 = por %p385, %p386
    %p388 = scmp.ne.s32.totalorder %s376, %s377
    %p389 = scmp.eq.s32.totalorder %s31, 1
    %p390 = por %p388, %p389
    %p392 = scmp.ne.s32.totalorder %s377, %s391
    %p393 = scmp.eq.s32.totalorder %s31, 0
    %p394 = por %p392, %p393
    %s396 = sadd.s32 %s395, 1
    %p399 = scmp.eq.s32.totalorder %s25, 1
    %p400 = scmp.ne.s32.totalorder %s395, %s397
    %p401 = scmp.eq.s32.totalorder %s25, 0
    %p402 = por %p400, %p401
    %p403 = scmp.ne.s32.totalorder %s395, %s397
    %p404 = scmp.eq.s32.totalorder %s30, 1
    %p405 = por %p403, %p404
    %p406 = scmp.ne.s32.totalorder %s397, %s398
    %p407 = scmp.eq.s32.totalorder %s30, 0
    %p408 = por %p406, %p407
    %p409 = scmp.ne.s32.totalorder %s397, %s398
    %p410 = scmp.eq.s32.totalorder %s31, 1
    %p411 = por %p409, %p410
    %p413 = scmp.ne.s32.totalorder %s398, %s412
    %p414 = scmp.eq.s32.totalorder %s31, 0
    %p415 = por %p413, %p414
    %s417 = sadd.s32 %s416, 1
    %p420 = scmp.eq.s32.totalorder %s25, 1
    %p421 = scmp.ne.s32.totalorder %s416, %s418
    %p422 = scmp.eq.s32.totalorder %s25, 0
    %p423 = por %p421, %p422
    %p424 = scmp.ne.s32.totalorder %s416, %s418
    %p425 = scmp.eq.s32.totalorder %s30, 1
    %p426 = por %p424, %p425
    %p427 = scmp.ne.s32.totalorder %s418, %s419
    %p428 = scmp.eq.s32.totalorder %s30, 0
    %p429 = por %p427, %p428
    %p430 = scmp.ne.s32.totalorder %s418, %s419
    %p431 = scmp.eq.s32.totalorder %s31, 1
    %p432 = por %p430, %p431
    %p434 = scmp.ne.s32.totalorder %s419, %s433
    %p435 = scmp.eq.s32.totalorder %s31, 0
    %p436 = por %p434, %p435
    %s437 = ssub.s32 %s25, %s32
    %p438 = scmp.eq.s32.totalorder %s437, 0
    %s440 = sadd.s32 %s439, 1
    %s441 = scalar_select %p438, %s439, %s440
    %p444 = pneg %p438
    %p445 = scmp.eq.s32.totalorder %s25, 1
    %p446 = por %p444, %p445
    %p447 = scmp.ne.s32.totalorder %s439, %s442
    %p448 = scmp.eq.s32.totalorder %s25, 0
    %p449 = por %p447, %p448
    %p450 = scmp.ne.s32.totalorder %s439, %s442
    %p451 = scmp.eq.s32.totalorder %s30, 1
    %p452 = por %p450, %p451
    %p453 = scmp.ne.s32.totalorder %s442, %s443
    %p454 = scmp.eq.s32.totalorder %s30, 0
    %p455 = por %p453, %p454
    %p456 = scmp.ne.s32.totalorder %s442, %s443
    %p457 = scmp.eq.s32.totalorder %s31, 1
    %p458 = por %p456, %p457
    %p460 = scmp.ne.s32.totalorder %s443, %s459
    %p461 = scmp.eq.s32.totalorder %s31, 0
    %p462 = por %p460, %p461
    %p463 = scmp.le.s32.totalorder 1, %s25
    %p464 = scmp.lt.s32.totalorder %s25, 3
    %p465 = pnand %p463, %p464
    %p466 = pneg %p465
    // Predicated region
    $region9: #{_forward_jit.3} parent=5 // pred_check
      _
    $region10: #{_forward_jit.3} parent=5 // pred_check_branch
      %468 = sbr.rel (%p465) target = $region12
    $region11: #{_forward_jit.3} parent=5 // pred_region
      %s469 = ssub.s32 %s25, 1
      // Predicated region
      $region13: #{_forward_jit.3} parent=11 // pred_check
        %p470 = pneg %p72
      $region14: #{_forward_jit.3} parent=11 // pred_check_branch
        %472 = sbr.rel (%p470) target = $region16
      $region15: #{_forward_jit.3} parent=11 // pred_region
        _
      $region16: #{_forward_jit.3} parent=11 // pred_fallthru
        _
      // Predicated region
      $region17: #{_forward_jit.3} parent=11 // pred_check
        %p473 = pneg %p93
      $region18: #{_forward_jit.3} parent=11 // pred_check_branch
        %475 = sbr.rel (%p473) target = $region20
      $region19: #{_forward_jit.3} parent=11 // pred_region
        _
      $region20: #{_forward_jit.3} parent=11 // pred_fallthru
        _
      // Predicated region
      $region21: #{_forward_jit.3} parent=11 // pred_check
        %p476 = pneg %p114
      $region22: #{_forward_jit.3} parent=11 // pred_check_branch
        %478 = sbr.rel (%p476) target = $region24
      $region23: #{_forward_jit.3} parent=11 // pred_region
        _
      $region24: #{_forward_jit.3} parent=11 // pred_fallthru
        _
      // Predicated region
      $region25: #{_forward_jit.3} parent=11 // pred_check
        %p479 = pneg %p135
      $region26: #{_forward_jit.3} parent=11 // pred_check_branch
        %481 = sbr.rel (%p479) target = $region28
      $region27: #{_forward_jit.3} parent=11 // pred_region
        _
      $region28: #{_forward_jit.3} parent=11 // pred_fallthru
        _
      // Predicated region
      $region29: #{_forward_jit.3} parent=11 // pred_check
        %p482 = pneg %p156
      $region30: #{_forward_jit.3} parent=11 // pred_check_branch
        %484 = sbr.rel (%p482) target = $region32
      $region31: #{_forward_jit.3} parent=11 // pred_region
        _
      $region32: #{_forward_jit.3} parent=11 // pred_fallthru
        _
      // Predicated region
      $region33: #{_forward_jit.3} parent=11 // pred_check
        %p485 = pneg %p177
      $region34: #{_forward_jit.3} parent=11 // pred_check_branch
        %487 = sbr.rel (%p485) target = $region36
      $region35: #{_forward_jit.3} parent=11 // pred_region
        _
      $region36: #{_forward_jit.3} parent=11 // pred_fallthru
        _
      // Predicated region
      $region37: #{_forward_jit.3} parent=11 // pred_check
        %p488 = pneg %p198
      $region38: #{_forward_jit.3} parent=11 // pred_check_branch
        %490 = sbr.rel (%p488) target = $region40
      $region39: #{_forward_jit.3} parent=11 // pred_region
        _
      $region40: #{_forward_jit.3} parent=11 // pred_fallthru
        _
      // Predicated region
      $region41: #{_forward_jit.3} parent=11 // pred_check
        %p491 = pneg %p219
      $region42: #{_forward_jit.3} parent=11 // pred_check_branch
        %493 = sbr.rel (%p491) target = $region44
      $region43: #{_forward_jit.3} parent=11 // pred_region
        _
      $region44: #{_forward_jit.3} parent=11 // pred_fallthru
        _
      // Predicated region
      $region45: #{_forward_jit.3} parent=11 // pred_check
        %p494 = pneg %p240
      $region46: #{_forward_jit.3} parent=11 // pred_check_branch
        %496 = sbr.rel (%p494) target = $region48
      $region47: #{_forward_jit.3} parent=11 // pred_region
        _
      $region48: #{_forward_jit.3} parent=11 // pred_fallthru
        _
      // Predicated region
      $region49: #{_forward_jit.3} parent=11 // pred_check
        %p497 = pneg %p261
      $region50: #{_forward_jit.3} parent=11 // pred_check_branch
        %499 = sbr.rel (%p497) target = $region52
      $region51: #{_forward_jit.3} parent=11 // pred_region
        _
      $region52: #{_forward_jit.3} parent=11 // pred_fallthru
        _
      // Predicated region
      $region53: #{_forward_jit.3} parent=11 // pred_check
        %p500 = pneg %p282
      $region54: #{_forward_jit.3} parent=11 // pred_check_branch
        %502 = sbr.rel (%p500) target = $region56
      $region55: #{_forward_jit.3} parent=11 // pred_region
        _
      $region56: #{_forward_jit.3} parent=11 // pred_fallthru
        _
      // Predicated region
      $region57: #{_forward_jit.3} parent=11 // pred_check
        %p503 = pneg %p303
      $region58: #{_forward_jit.3} parent=11 // pred_check_branch
        %505 = sbr.rel (%p503) target = $region60
      $region59: #{_forward_jit.3} parent=11 // pred_region
        _
      $region60: #{_forward_jit.3} parent=11 // pred_fallthru
        _
      // Predicated region
      $region61: #{_forward_jit.3} parent=11 // pred_check
        %p506 = pneg %p324
      $region62: #{_forward_jit.3} parent=11 // pred_check_branch
        %508 = sbr.rel (%p506) target = $region64
      $region63: #{_forward_jit.3} parent=11 // pred_region
        _
      $region64: #{_forward_jit.3} parent=11 // pred_fallthru
        _
      // Predicated region
      $region65: #{_forward_jit.3} parent=11 // pred_check
        %p509 = pneg %p345
      $region66: #{_forward_jit.3} parent=11 // pred_check_branch
        %511 = sbr.rel (%p509) target = $region68
      $region67: #{_forward_jit.3} parent=11 // pred_region
        _
      $region68: #{_forward_jit.3} parent=11 // pred_fallthru
        _
      // Predicated region
      $region69: #{_forward_jit.3} parent=11 // pred_check
        %p512 = pneg %p366
      $region70: #{_forward_jit.3} parent=11 // pred_check_branch
        %514 = sbr.rel (%p512) target = $region72
      $region71: #{_forward_jit.3} parent=11 // pred_region
        _
      $region72: #{_forward_jit.3} parent=11 // pred_fallthru
        _
      // Predicated region
      $region73: #{_forward_jit.3} parent=11 // pred_check
        %p515 = pneg %p387
      $region74: #{_forward_jit.3} parent=11 // pred_check_branch
        %517 = sbr.rel (%p515) target = $region76
      $region75: #{_forward_jit.3} parent=11 // pred_region
        _
      $region76: #{_forward_jit.3} parent=11 // pred_fallthru
        _
      // Predicated region
      $region77: #{_forward_jit.3} parent=11 // pred_check
        %p518 = pneg %p408
      $region78: #{_forward_jit.3} parent=11 // pred_check_branch
        %520 = sbr.rel (%p518) target = $region80
      $region79: #{_forward_jit.3} parent=11 // pred_region
        _
      $region80: #{_forward_jit.3} parent=11 // pred_fallthru
        _
      // Predicated region
      $region81: #{_forward_jit.3} parent=11 // pred_check
        %p521 = pneg %p429
      $region82: #{_forward_jit.3} parent=11 // pred_check_branch
        %523 = sbr.rel (%p521) target = $region84
      $region83: #{_forward_jit.3} parent=11 // pred_region
        _
      $region84: #{_forward_jit.3} parent=11 // pred_fallthru
        _
    $region12: #{_forward_jit.3} parent=5 // pred_fallthru
      _
    %p524 = scmp.lt.s32.totalorder %s25, 2
    // Predicated region
    $region85: #{_forward_jit.3} parent=5 // pred_check
      %p525 = pneg %p524
    $region86: #{_forward_jit.3} parent=5 // pred_check_branch
      %527 = sbr.rel (%p525) target = $region88
    $region87: #{_forward_jit.3} parent=5 // pred_region
      // Predicated region
      $region89: #{_forward_jit.3} parent=87 // pred_check
        %p528 = pneg %p45
      $region90: #{_forward_jit.3} parent=87 // pred_check_branch
        %530 = sbr.rel (%p528) target = $region92
      $region91: #{_forward_jit.3} parent=87 // pred_region
        %p531 = scmp.lt.s32.totalorder %s25, 1
        %s532 = scalar_select %p531, %s25, 1
        %s533 = smul.addr %s532, 2
        %s534 = smul.addr %s533, 8
        %s535 = scalar_lea.vmem %s0, %s534
      $region92: #{_forward_jit.3} parent=87 // pred_fallthru
        _
    $region88: #{_forward_jit.3} parent=5 // pred_fallthru
      _
    %p536 = scmp.le.s32.totalorder 1, %s25
    %p537 = scmp.lt.s32.totalorder %s25, 3
    %p538 = pnand %p536, %p537
    %p539 = pneg %p538
    // Predicated region
    $region93: #{_forward_jit.3} parent=5 // pred_check
      _
    $region94: #{_forward_jit.3} parent=5 // pred_check_branch
      %541 = sbr.rel (%p538) target = $region96
    $region95: #{_forward_jit.3} parent=5 // pred_region
      %s542 = ssub.s32 %s25, 1
      %p543 = scmp.lt.s32.totalorder %s30, 1
      %s544 = scalar_select %p543, %s30, 1
      %s545 = smul.addr %s544, 2
      %s546 = smul.addr %s545, 8
      %s547 = scalar_lea.vmem %s0, %s546
      %p548 = pneg %p51
      %p549 = pneg %p48
      %p550 = pneg %p72
      %p551 = pneg %p69
      %p552 = pneg %p93
      %p553 = pneg %p90
      %p554 = pneg %p114
      %p555 = pneg %p111
      %p556 = pneg %p135
      %p557 = pneg %p132
      %p558 = pneg %p156
      %p559 = pneg %p153
      %p560 = pneg %p177
      %p561 = pneg %p174
      %p562 = pneg %p198
      %p563 = pneg %p195
      %p564 = pneg %p219
      %p565 = pneg %p216
      %p566 = pneg %p240
      %p567 = pneg %p237
      %p568 = pneg %p261
      %p569 = pneg %p258
      %p570 = pneg %p282
      %p571 = pneg %p279
      %p572 = pneg %p303
      %p573 = pneg %p300
      %p574 = pneg %p324
      %p575 = pneg %p321
      %p576 = pneg %p345
      %p577 = pneg %p342
      %p578 = pneg %p366
      %p579 = pneg %p363
      %p580 = pneg %p387
      %p581 = pneg %p384
      %p582 = pneg %p408
      %p583 = pneg %p405
      %p584 = pneg %p429
      %p585 = pneg %p426
      %p586 = pneg %p455
      %p587 = pneg %p452
      %p588 = scmp.lt.s32.totalorder %s30, 1
      %s589 = scalar_select %p588, %s30, 1
      %s590 = smul.addr %s589, 3
      %s591 = smul.addr %s590, 8
      %s592 = scalar_lea.vmem %s19, %s591
      %p593 = scmp.lt.s32.totalorder %s30, 1
      %s594 = scalar_select %p593, %s30, 1
      %s595 = smul.addr %s594, 2
      %s596 = smul.addr %s595, 8
      %s597 = scalar_lea.vmem %s0, %s596
      %p598 = scmp.lt.s32.totalorder %s30, 1
      %s599 = scalar_select %p598, %s30, 1
      %s600 = smul.addr %s599, 3
      %s601 = smul.addr %s600, 8
      %s602 = scalar_lea.vmem %s19, %s601
      %v603 = vld [vmem:[%s597] sm:$0xff]
      %v604 = vld [vmem:[%s597 + $0x8] sm:$0xff]
      %v605 = vld [vmem:[%s3] sm:$0xff]
      %v606 = vld [vmem:[%s3 + $0x8] sm:$0xff]
      %v607 = vld [vmem:[%s3 + $0x10] sm:$0xff]
      %v608 = vld [vmem:[%s3 + $0x18] sm:$0xff]
      %v609 = vld [vmem:[%s3 + $0x20] sm:$0xff]
      %v610 = vld [vmem:[%s3 + $0x28] sm:$0xff]
      %v611 = vld [vmem:[%s4] sm:$0x1]
      %v613 = vperm.slane %v611, 0
      %vm615 = vcmask 392192
      %v617 = vsel %vm615, %v603, 0
      %v620 = vsel %vm615, %v604, 0
      %622 = vmatpush.msra.mxu0 0.0
      %623 = vmatpush.msra.mxu0 0.0
      %624 = vmatpush.msra.mxu0 0.0
      %625 = vmatpush.msra.mxu0 0.0
      %626 = vmatpush.msra.mxu0 0.0
      %627 = vmatpush.msra.mxu0 0.0
      %628 = vmatpush.msra.mxu0 0.0
      %629 = vmatpush.msra.mxu0 0.0
      %630 = vmatpush.msra.mxu0 0.0
      %631 = vmatpush.msra.mxu0 0.0
      %632 = vmatpush.msra.mxu0 %v610
      %633 = vmatpush.msra.mxu0 %v609
      %634 = vmatpush.msra.mxu0 %v608
      %635 = vmatpush.msra.mxu0 %v607
      %636 = vmatpush.msra.mxu0 %v606
      %637 = vmatpush.msra.mxu0 %v605
      %638 = vmatmul.f32.gmra.mxu0 %v617
      %v639 = vpop.f32.mrf.mxu0
      %v640 = vadd.f32 %v613, %v639
      %641 = vmatmul.f32.gmra.mxu0 %v620
      %v642 = vpop.f32.mrf.mxu0
      %v643 = vadd.f32 %v613, %v642
      %644 = vdwg.mxu0
      %v645 = vld [vmem:[%s1] sm:$0x1]
      %vm646 = vcmask 253952
      %647 = vst.msk [vmem:[%s602] sm:$0x1] %vm646, %v645
      %vm648 = vcmask 261120
      %649 = vst.msk [vmem:[%s602 + $0x1] sm:$0xff] %vm648, %v640
      %650 = vst.msk [vmem:[%s602 + $0x9] sm:$0xff] %vm648, %v643
      %v651 = vld [vmem:[%s602] sm:$0xff]
      %v652 = vld [vmem:[%s602 + $0x8] sm:$0xff]
      %v653 = vld [vmem:[%s602 + $0x10] sm:$0x1]
      %v654 = vld [vmem:[%s2] sm:$0xff]
      %v655 = vld [vmem:[%s2 + $0x8] sm:$0xff]
      %v656 = vld [vmem:[%s2 + $0x10] sm:$0x1]
      %v657 = vadd.f32 %v651, %v654
      %v658 = vadd.f32 %v652, %v655
      %v659 = vadd.f32 %v653, %v656
      %v660 = vld [vmem:[%s5] sm:$0x1]
      %v661 = vld [vmem:[%s6] sm:$0x1]
      %v662 = vsel %vm648, %v657, 0.0
      %663 = vadd.xlane.f32.xlu0 %v662
      %v664 = vpop.xlane.xlu0 %663
      %v665 = vsel %vm648, %v658, 0.0
      %666 = vadd.xlane.f32.xlu0 %v665
      %v667 = vpop.xlane.xlu0 %666
      %v668 = vsel %vm646, %v659, 0.0
      %669 = vadd.xlane.f32.xlu0 %v668
      %v670 = vpop.xlane.xlu0 %669
      %v671 = vrcp.pop 32.0
      %v672 = vmul.f32 32.0, %v671
      %v673 = vsub.f32 1.0, %v672
      %v674 = vmul.f32 %v671, %v673
      %v675 = vadd.f32 %v671, %v674
      %vm676 = vweird.f32 %v671
      %v677 = vsel %vm676, %v671, %v675
      %v678 = vmul.f32 %v664, %v677
      %v679 = vmul.f32 %v667, %v677
      %v680 = vmul.f32 %v670, %v677
      %v681 = vsub.f32 %v657, %v678
      %v682 = vsub.f32 %v658, %v679
      %v683 = vsub.f32 %v659, %v680
      %v684 = vmul.f32 %v681, %v681
      %v685 = vmul.f32 %v682, %v682
      %v686 = vmul.f32 %v683, %v683
      %v687 = vsel %vm648, %v684, 0.0
      %688 = vadd.xlane.f32.xlu0 %v687
      %v689 = vpop.xlane.xlu0 %688
      %v690 = vsel %vm648, %v685, 0.0
      %691 = vadd.xlane.f32.xlu0 %v690
      %v692 = vpop.xlane.xlu0 %691
      %v693 = vsel %vm646, %v686, 0.0
      %694 = vadd.xlane.f32.xlu0 %v693
      %v695 = vpop.xlane.xlu0 %694
      %v696 = vmul.f32 %v689, %v677
      %v697 = vmul.f32 %v692, %v677
      %v698 = vmul.f32 %v695, %v677
      %v699 = vadd.f32 %v696, 1e-06
      %v700 = vadd.f32 %v697, 1e-06
      %v701 = vadd.f32 %v698, 1e-06
      %v702 = vrsqrt.pop %v699
      %v703 = vmul.f32 %v702, %v699
      %v704 = vmul.f32 %v703, %v702
      %v705 = vmul.f32 0.5, %v704
      %v706 = vsub.f32 1.5, %v705
      %v707 = vmul.f32 %v702, %v706
      %vm708 = vweird.f32 %v699
      %vm709 = vweird.f32 %v702
      %vm710 = vmor %vm708, %vm709
      %v711 = vsel %vm710, %v702, %v707
      %v712 = vrsqrt.pop %v700
      %v713 = vmul.f32 %v712, %v700
      %v714 = vmul.f32 %v713, %v712
      %v715 = vmul.f32 0.5, %v714
      %v716 = vsub.f32 1.5, %v715
      %v717 = vmul.f32 %v712, %v716
      %vm718 = vweird.f32 %v700
      %vm719 = vweird.f32 %v712
      %vm720 = vmor %vm718, %vm719
      %v721 = vsel %vm720, %v712, %v717
      %v722 = vrsqrt.pop %v701
      %v723 = vmul.f32 %v722, %v701
      %v724 = vmul.f32 %v723, %v722
      %v725 = vmul.f32 0.5, %v724
      %v726 = vsub.f32 1.5, %v725
      %v727 = vmul.f32 %v722, %v726
      %vm728 = vweird.f32 %v701
      %vm729 = vweird.f32 %v722
      %vm730 = vmor %vm728, %vm729
      %v731 = vsel %vm730, %v722, %v727
      %v732 = vmul.f32 %v681, %v711
      %v733 = vmul.f32 %v682, %v721
      %v734 = vmul.f32 %v683, %v731
      %v736 = vperm.slane %v660, 0
      %v738 = vmul.f32 %v732, %v736
      %v739 = vmul.f32 %v733, %v736
      %v740 = vmul.f32 %v734, %v736
      %v742 = vperm.slane %v661, 0
      %v744 = vadd.f32 %v738, %v742
      %v745 = vadd.f32 %v739, %v742
      %v746 = vadd.f32 %v740, %v742
      %v747 = vld [vmem:[%s7] sm:$0xff]
      %v748 = vld [vmem:[%s7 + $0x8] sm:$0xff]
      %v749 = vld [vmem:[%s7 + $0x10] sm:$0xff]
      %v750 = vld [vmem:[%s7 + $0x18] sm:$0xff]
      %v751 = vld [vmem:[%s8] sm:$0x1]
      %v753 = vperm.slane %v751, 0
      %v756 = vsel %vm648, %v744, 0
      %v759 = vsel %vm648, %v745, 0
      %v762 = vsel %vm648, %v746, 0
      %764 = vmatpush.msra.mxu0 0.0
      %765 = vmatpush.msra.mxu0 0.0
      %766 = vmatpush.msra.mxu0 0.0
      %767 = vmatpush.msra.mxu0 0.0
      %768 = vmatpush.msra.mxu0 0.0
      %769 = vmatpush.msra.mxu0 0.0
      %770 = vmatpush.msra.mxu0 0.0
      %771 = vmatpush.msra.mxu0 0.0
      %772 = vmatpush.msra.mxu0 0.0
      %773 = vmatpush.msra.mxu0 0.0
      %774 = vmatpush.msra.mxu0 0.0
      %775 = vmatpush.msra.mxu0 0.0
      %776 = vmatpush.msra.mxu0 %v750
      %777 = vmatpush.msra.mxu0 %v749
      %778 = vmatpush.msra.mxu0 %v748
      %779 = vmatpush.msra.mxu0 %v747
      %780 = vmatmul.f32.gmra.mxu0 %v756
      %v781 = vpop.f32.mrf.mxu0
      %v782 = vadd.f32 %v753, %v781
      %783 = vmatmul.f32.gmra.mxu0 %v759
      %v784 = vpop.f32.mrf.mxu0
      %v785 = vadd.f32 %v753, %v784
      %786 = vmatmul.f32.gmra.mxu0 %v762
      %v787 = vpop.f32.mrf.mxu0
      %v788 = vadd.f32 %v753, %v787
      %789 = vdwg.mxu0
      %793 = vrot.lane.b32.xlu0 %v782, 96
      %v794 = vpop.permute.xlu0 %793
      %795 = vrot.lane.b32.xlu0 %v785, 96
      %v796 = vpop.permute.xlu0 %795
      %797 = vrot.lane.b32.xlu0 %v788, 96
      %v798 = vpop.permute.xlu0 %797
      %vm799 = vcmask 64512
      %v800 = vsel %vm799, %v782, 0
      %v802 = vsel %vm799, %v785, 0
      %v804 = vsel %vm799, %v788, 0
      %v806 = vsel %vm799, %v794, 0
      %v808 = vsel %vm799, %v796, 0
      %v810 = vsel %vm799, %v798, 0
      %812 = vmatpush.xpose.msra.mxu0 0.0
      %813 = vmatpush.xpose.msra.mxu0 0.0
      %814 = vmatpush.xpose.msra.mxu0 0.0
      %815 = vmatpush.xpose.msra.mxu0 0.0
      %816 = vmatpush.xpose.msra.mxu0 0.0
      %817 = vmatpush.xpose.msra.mxu0 0.0
      %818 = vmatpush.xpose.msra.mxu0 0.0
      %819 = vmatpush.xpose.msra.mxu0 0.0
      %820 = vmatpush.xpose.msra.mxu0 0.0
      %821 = vmatpush.xpose.msra.mxu0 0.0
      %822 = vmatpush.xpose.msra.mxu0 0.0
      %823 = vmatpush.xpose.msra.mxu0 0.0
      %824 = vmatpush.xpose.msra.mxu0 0.0
      %825 = vmatpush.xpose.msra.mxu0 %v810
      %826 = vmatpush.xpose.msra.mxu0 %v808
      %827 = vmatpush.xpose.msra.mxu0 %v806
      %828 = vmatmul.f32.gmra.mxu0 %v800
      %v829 = vpop.f32.mrf.mxu0
      %v830 = vadd.f32 0.0, %v829
      %831 = vmatmul.f32.gmra.mxu0 %v802
      %v832 = vpop.f32.mrf.mxu0
      %v833 = vadd.f32 0.0, %v832
      %834 = vmatmul.f32.gmra.mxu0 %v804
      %v835 = vpop.f32.mrf.mxu0
      %v836 = vadd.f32 0.0, %v835
      %837 = vdwg.mxu0
      %v838 = vmul.f32 %v830, 0.35355338
      %v839 = vmul.f32 %v833, 0.35355338
      %v840 = vmul.f32 %v836, 0.35355338
      %vm841 = vcmask 138240
      %v842 = vsel %vm841, %v838, -inf
      %843 = vmax.xlane.f32.xlu0 %v842
      %v844 = vpop.xlane.xlu0 %843
      %v845 = vsel %vm841, %v839, -inf
      %846 = vmax.xlane.f32.xlu0 %v845
      %v847 = vpop.xlane.xlu0 %846
      %vm848 = vcmask 131072
      %v849 = vsel %vm848, %v840, -inf
      %850 = vmax.xlane.f32.xlu0 %v849
      %v851 = vpop.xlane.xlu0 %850
      %v852 = vsub.f32 %v838, %v844
      %v853 = vsub.f32 %v839, %v847
      %v854 = vsub.f32 %v840, %v851
      %v855 = vmul.f32 %v852, 1.442695
      %v856 = vpow.pop %v855
      %v857 = vmul.f32 %v853, 1.442695
      %v858 = vpow.pop %v857
      %v859 = vmul.f32 %v854, 1.442695
      %v860 = vpow.pop %v859
      %v861 = vsel %vm841, %v856, 0.0
      %862 = vadd.xlane.f32.xlu0 %v861
      %v863 = vpop.xlane.xlu0 %862
      %v864 = vsel %vm841, %v858, 0.0
      %865 = vadd.xlane.f32.xlu0 %v864
      %v866 = vpop.xlane.xlu0 %865
      %v867 = vsel %vm848, %v860, 0.0
      %868 = vadd.xlane.f32.xlu0 %v867
      %v869 = vpop.xlane.xlu0 %868
      %v870 = vrcp.pop %v863
      %v871 = vrcp.pop %v866
      %v872 = vrcp.pop %v869
      %v873 = vmul.f32 %v856, %v870
      %v874 = vmul.f32 %v858, %v871
      %v875 = vmul.f32 %v860, %v872
      %876 = vrot.lane.b32.xlu0 %v782, 64
      %v877 = vpop.permute.xlu0 %876
      %878 = vrot.lane.b32.xlu0 %v785, 64
      %v879 = vpop.permute.xlu0 %878
      %880 = vrot.lane.b32.xlu0 %v788, 64
      %v881 = vpop.permute.xlu0 %880
      %v885 = vsel %vm841, %v873, 0
      %v888 = vsel %vm841, %v874, 0
      %v891 = vsel %vm841, %v875, 0
      %vm893 = vcmask 1040384
      %v894 = vsel %vm893, %v881, 0
      %896 = vmatpush.msra.mxu0 0.0
      %897 = vmatpush.msra.mxu0 0.0
      %898 = vmatpush.msra.mxu0 0.0
      %899 = vmatpush.msra.mxu0 0.0
      %900 = vmatpush.msra.mxu0 0.0
      %901 = vmatpush.msra.mxu0 0.0
      %902 = vmatpush.msra.mxu0 0.0
      %903 = vmatpush.msra.mxu0 0.0
      %904 = vmatpush.msra.mxu0 0.0
      %905 = vmatpush.msra.mxu0 0.0
      %906 = vmatpush.msra.mxu0 0.0
      %907 = vmatpush.msra.mxu0 0.0
      %908 = vmatpush.msra.mxu0 0.0
      %909 = vmatpush.msra.mxu0 %v894
      %910 = vmatpush.msra.mxu0 %v879
      %911 = vmatpush.msra.mxu0 %v877
      %912 = vmatmul.f32.gmra.mxu0 %v885
      %v913 = vpop.f32.mrf.mxu0
      %v914 = vadd.f32 0.0, %v913
      %915 = vmatmul.f32.gmra.mxu0 %v888
      %v916 = vpop.f32.mrf.mxu0
      %v917 = vadd.f32 0.0, %v916
      %918 = vmatmul.f32.gmra.mxu0 %v891
      %v919 = vpop.f32.mrf.mxu0
      %v920 = vadd.f32 0.0, %v919
      %921 = vdwg.mxu0
      %v922 = vld [vmem:[%s9] sm:$0xff]
      %923 = vrot.lane.b32.xlu0 %v782, 120
      %v924 = vpop.permute.xlu0 %923
      %925 = vrot.lane.b32.xlu0 %v785, 120
      %v926 = vpop.permute.xlu0 %925
      %927 = vrot.lane.b32.xlu0 %v788, 120
      %v928 = vpop.permute.xlu0 %927
      %929 = vrot.lane.b32.xlu0 %v782, 88
      %v930 = vpop.permute.xlu0 %929
      %931 = vrot.lane.b32.xlu0 %v785, 88
      %v932 = vpop.permute.xlu0 %931
      %933 = vrot.lane.b32.xlu0 %v788, 88
      %v934 = vpop.permute.xlu0 %933
      %v935 = vsel %vm799, %v924, 0
      %v937 = vsel %vm799, %v926, 0
      %v939 = vsel %vm799, %v928, 0
      %v941 = vsel %vm799, %v930, 0
      %v943 = vsel %vm799, %v932, 0
      %v945 = vsel %vm799, %v934, 0
      %947 = vmatpush.xpose.msra.mxu0 0.0
      %948 = vmatpush.xpose.msra.mxu0 0.0
      %949 = vmatpush.xpose.msra.mxu0 0.0
      %950 = vmatpush.xpose.msra.mxu0 0.0
      %951 = vmatpush.xpose.msra.mxu0 0.0
      %952 = vmatpush.xpose.msra.mxu0 0.0
      %953 = vmatpush.xpose.msra.mxu0 0.0
      %954 = vmatpush.xpose.msra.mxu0 0.0
      %955 = vmatpush.xpose.msra.mxu0 0.0
      %956 = vmatpush.xpose.msra.mxu0 0.0
      %957 = vmatpush.xpose.msra.mxu0 0.0
      %958 = vmatpush.xpose.msra.mxu0 0.0
      %959 = vmatpush.xpose.msra.mxu0 0.0
      %960 = vmatpush.xpose.msra.mxu0 %v945
      %961 = vmatpush.xpose.msra.mxu0 %v943
      %962 = vmatpush.xpose.msra.mxu0 %v941
      %963 = vmatmul.f32.gmra.mxu0 %v935
      %v964 = vpop.f32.mrf.mxu0
      %v965 = vadd.f32 0.0, %v964
      %966 = vmatmul.f32.gmra.mxu0 %v937
      %v967 = vpop.f32.mrf.mxu0
      %v968 = vadd.f32 0.0, %v967
      %969 = vmatmul.f32.gmra.mxu0 %v939
      %v970 = vpop.f32.mrf.mxu0
      %v971 = vadd.f32 0.0, %v970
      %972 = vdwg.mxu0
      %v973 = vmul.f32 %v965, 0.35355338
      %v974 = vmul.f32 %v968, 0.35355338
      %v975 = vmul.f32 %v971, 0.35355338
      %v976 = vsel %vm841, %v973, -inf
      %977 = vmax.xlane.f32.xlu0 %v976
      %v978 = vpop.xlane.xlu0 %977
      %v979 = vsel %vm841, %v974, -inf
      %980 = vmax.xlane.f32.xlu0 %v979
      %v981 = vpop.xlane.xlu0 %980
      %v982 = vsel %vm848, %v975, -inf
      %983 = vmax.xlane.f32.xlu0 %v982
      %v984 = vpop.xlane.xlu0 %983
      %v985 = vsub.f32 %v973, %v978
      %v986 = vsub.f32 %v974, %v981
      %v987 = vsub.f32 %v975, %v984
      %v988 = vmul.f32 %v985, 1.442695
      %v989 = vpow.pop %v988
      %v990 = vmul.f32 %v986, 1.442695
      %v991 = vpow.pop %v990
      %v992 = vmul.f32 %v987, 1.442695
      %v993 = vpow.pop %v992
      %v994 = vsel %vm841, %v989, 0.0
      %995 = vadd.xlane.f32.xlu0 %v994
      %v996 = vpop.xlane.xlu0 %995
      %v997 = vsel %vm841, %v991, 0.0
      %998 = vadd.xlane.f32.xlu0 %v997
      %v999 = vpop.xlane.xlu0 %998
      %v1000 = vsel %vm848, %v993, 0.0
      %1001 = vadd.xlane.f32.xlu0 %v1000
      %v1002 = vpop.xlane.xlu0 %1001
      %v1003 = vrcp.pop %v996
      %v1004 = vrcp.pop %v999
      %v1005 = vrcp.pop %v1002
      %v1006 = vmul.f32 %v989, %v1003
      %v1007 = vmul.f32 %v991, %v1004
      %v1008 = vmul.f32 %v993, %v1005
      %1009 = vrot.lane.b32.xlu0 %v782, 56
      %v1010 = vpop.permute.xlu0 %1009
      %1011 = vrot.lane.b32.xlu0 %v785, 56
      %v1012 = vpop.permute.xlu0 %1011
      %1013 = vrot.lane.b32.xlu0 %v788, 56
      %v1014 = vpop.permute.xlu0 %1013
      %v1018 = vsel %vm841, %v1006, 0
      %v1021 = vsel %vm841, %v1007, 0
      %v1024 = vsel %vm841, %v1008, 0
      %v1026 = vsel %vm893, %v1014, 0
      %1028 = vmatpush.msra.mxu0 0.0
      %1029 = vmatpush.msra.mxu0 0.0
      %1030 = vmatpush.msra.mxu0 0.0
      %1031 = vmatpush.msra.mxu0 0.0
      %1032 = vmatpush.msra.mxu0 0.0
      %1033 = vmatpush.msra.mxu0 0.0
      %1034 = vmatpush.msra.mxu0 0.0
      %1035 = vmatpush.msra.mxu0 0.0
      %1036 = vmatpush.msra.mxu0 0.0
      %1037 = vmatpush.msra.mxu0 0.0
      %1038 = vmatpush.msra.mxu0 0.0
      %1039 = vmatpush.msra.mxu0 0.0
      %1040 = vmatpush.msra.mxu0 0.0
      %1041 = vmatpush.msra.mxu0 %v1026
      %1042 = vmatpush.msra.mxu0 %v1012
      %1043 = vmatpush.msra.mxu0 %v1010
      %1044 = vmatmul.f32.gmra.mxu0 %v1018
      %v1045 = vpop.f32.mrf.mxu0
      %v1046 = vadd.f32 0.0, %v1045
      %1047 = vmatmul.f32.gmra.mxu0 %v1021
      %v1048 = vpop.f32.mrf.mxu0
      %v1049 = vadd.f32 0.0, %v1048
      %1050 = vmatmul.f32.gmra.mxu0 %v1024
      %v1051 = vpop.f32.mrf.mxu0
      %v1052 = vadd.f32 0.0, %v1051
      %1053 = vdwg.mxu0
      %v1054 = vld [vmem:[%s9 + $0x8] sm:$0xff]
      %v1056 = vsel %vm799, %v1046, 0
      %v1059 = vsel %vm799, %v1049, 0
      %v1062 = vsel %vm799, %v1052, 0
      %1064 = vmatpush.msra.mxu0 0.0
      %1065 = vmatpush.msra.mxu0 0.0
      %1066 = vmatpush.msra.mxu0 0.0
      %1067 = vmatpush.msra.mxu0 0.0
      %1068 = vmatpush.msra.mxu0 0.0
      %1069 = vmatpush.msra.mxu0 0.0
      %1070 = vmatpush.msra.mxu0 0.0
      %1071 = vmatpush.msra.mxu0 0.0
      %1072 = vmatpush.msra.mxu0 0.0
      %1073 = vmatpush.msra.mxu0 0.0
      %1074 = vmatpush.msra.mxu0 0.0
      %1075 = vmatpush.msra.mxu0 0.0
      %1076 = vmatpush.msra.mxu0 0.0
      %1077 = vmatpush.msra.mxu0 0.0
      %1078 = vmatpush.msra.mxu0 0.0
      %1079 = vmatpush.msra.mxu0 %v1054
      %1080 = vmatmul.f32.gmra.mxu0 %v1056
      %v1081 = vpop.f32.mrf.mxu0
      %v1082 = vadd.f32 0.0, %v1081
      %1083 = vmatmul.f32.gmra.mxu0 %v1059
      %v1084 = vpop.f32.mrf.mxu0
      %v1085 = vadd.f32 0.0, %v1084
      %1086 = vmatmul.f32.gmra.mxu0 %v1062
      %v1087 = vpop.f32.mrf.mxu0
      %v1088 = vadd.f32 0.0, %v1087
      %1089 = vdwg.mxu0
      %v1091 = vsel %vm799, %v914, 0
      %v1094 = vsel %vm799, %v917, 0
      %v1097 = vsel %vm799, %v920, 0
      %1099 = vmatpush.msra.mxu0 0.0
      %1100 = vmatpush.msra.mxu0 0.0
      %1101 = vmatpush.msra.mxu0 0.0
      %1102 = vmatpush.msra.mxu0 0.0
      %1103 = vmatpush.msra.mxu0 0.0
      %1104 = vmatpush.msra.mxu0 0.0
      %1105 = vmatpush.msra.mxu0 0.0
      %1106 = vmatpush.msra.mxu0 0.0
      %1107 = vmatpush.msra.mxu0 0.0
      %1108 = vmatpush.msra.mxu0 0.0
      %1109 = vmatpush.msra.mxu0 0.0
      %1110 = vmatpush.msra.mxu0 0.0
      %1111 = vmatpush.msra.mxu0 0.0
      %1112 = vmatpush.msra.mxu0 0.0
      %1113 = vmatpush.msra.mxu0 0.0
      %1114 = vmatpush.msra.mxu0 %v922
      %1115 = vmatmul.f32.gmra.mxu0 %v1091
      %v1116 = vpop.f32.mrf.mxu0
      %v1117 = vadd.f32 %v1082, %v1116
      %1118 = vmatmul.f32.gmra.mxu0 %v1094
      %v1119 = vpop.f32.mrf.mxu0
      %v1120 = vadd.f32 %v1085, %v1119
      %1121 = vmatmul.f32.gmra.mxu0 %v1097
      %v1122 = vpop.f32.mrf.mxu0
      %v1123 = vadd.f32 %v1088, %v1122
      %1124 = vdwg.mxu0
      %1125 = vrot.lane.b32.xlu0 %v782, 112
      %v1126 = vpop.permute.xlu0 %1125
      %1127 = vrot.lane.b32.xlu0 %v785, 112
      %v1128 = vpop.permute.xlu0 %1127
      %1129 = vrot.lane.b32.xlu0 %v788, 112
      %v1130 = vpop.permute.xlu0 %1129
      %1131 = vrot.lane.b32.xlu0 %v782, 80
      %v1132 = vpop.permute.xlu0 %1131
      %1133 = vrot.lane.b32.xlu0 %v785, 80
      %v1134 = vpop.permute.xlu0 %1133
      %1135 = vrot.lane.b32.xlu0 %v788, 80
      %v1136 = vpop.permute.xlu0 %1135
      %v1137 = vsel %vm799, %v1126, 0
      %v1139 = vsel %vm799, %v1128, 0
      %v1141 = vsel %vm799, %v1130, 0
      %v1143 = vsel %vm799, %v1132, 0
      %v1145 = vsel %vm799, %v1134, 0
      %v1147 = vsel %vm799, %v1136, 0
      %1149 = vmatpush.xpose.msra.mxu0 0.0
      %1150 = vmatpush.xpose.msra.mxu0 0.0
      %1151 = vmatpush.xpose.msra.mxu0 0.0
      %1152 = vmatpush.xpose.msra.mxu0 0.0
      %1153 = vmatpush.xpose.msra.mxu0 0.0
      %1154 = vmatpush.xpose.msra.mxu0 0.0
      %1155 = vmatpush.xpose.msra.mxu0 0.0
      %1156 = vmatpush.xpose.msra.mxu0 0.0
      %1157 = vmatpush.xpose.msra.mxu0 0.0
      %1158 = vmatpush.xpose.msra.mxu0 0.0
      %1159 = vmatpush.xpose.msra.mxu0 0.0
      %1160 = vmatpush.xpose.msra.mxu0 0.0
      %1161 = vmatpush.xpose.msra.mxu0 0.0
      %1162 = vmatpush.xpose.msra.mxu0 %v1147
      %1163 = vmatpush.xpose.msra.mxu0 %v1145
      %1164 = vmatpush.xpose.msra.mxu0 %v1143
      %1165 = vmatmul.f32.gmra.mxu0 %v1137
      %v1166 = vpop.f32.mrf.mxu0
      %v1167 = vadd.f32 0.0, %v1166
      %1168 = vmatmul.f32.gmra.mxu0 %v1139
      %v1169 = vpop.f32.mrf.mxu0
      %v1170 = vadd.f32 0.0, %v1169
      %1171 = vmatmul.f32.gmra.mxu0 %v1141
      %v1172 = vpop.f32.mrf.mxu0
      %v1173 = vadd.f32 0.0, %v1172
      %1174 = vdwg.mxu0
      %v1175 = vmul.f32 %v1167, 0.35355338
      %v1176 = vmul.f32 %v1170, 0.35355338
      %v1177 = vmul.f32 %v1173, 0.35355338
      %v1178 = vsel %vm841, %v1175, -inf
      %1179 = vmax.xlane.f32.xlu0 %v1178
      %v1180 = vpop.xlane.xlu0 %1179
      %v1181 = vsel %vm841, %v1176, -inf
      %1182 = vmax.xlane.f32.xlu0 %v1181
      %v1183 = vpop.xlane.xlu0 %1182
      %v1184 = vsel %vm848, %v1177, -inf
      %1185 = vmax.xlane.f32.xlu0 %v1184
      %v1186 = vpop.xlane.xlu0 %1185
      %v1187 = vsub.f32 %v1175, %v1180
      %v1188 = vsub.f32 %v1176, %v1183
      %v1189 = vsub.f32 %v1177, %v1186
      %v1190 = vmul.f32 %v1187, 1.442695
      %v1191 = vpow.pop %v1190
      %v1192 = vmul.f32 %v1188, 1.442695
      %v1193 = vpow.pop %v1192
      %v1194 = vmul.f32 %v1189, 1.442695
      %v1195 = vpow.pop %v1194
      %v1196 = vsel %vm841, %v1191, 0.0
      %1197 = vadd.xlane.f32.xlu0 %v1196
      %v1198 = vpop.xlane.xlu0 %1197
      %v1199 = vsel %vm841, %v1193, 0.0
      %1200 = vadd.xlane.f32.xlu0 %v1199
      %v1201 = vpop.xlane.xlu0 %1200
      %v1202 = vsel %vm848, %v1195, 0.0
      %1203 = vadd.xlane.f32.xlu0 %v1202
      %v1204 = vpop.xlane.xlu0 %1203
      %v1205 = vrcp.pop %v1198
      %v1206 = vrcp.pop %v1201
      %v1207 = vrcp.pop %v1204
      %v1208 = vmul.f32 %v1191, %v1205
      %v1209 = vmul.f32 %v1193, %v1206
      %v1210 = vmul.f32 %v1195, %v1207
      %1211 = vrot.lane.b32.xlu0 %v782, 48
      %v1212 = vpop.permute.xlu0 %1211
      %1213 = vrot.lane.b32.xlu0 %v785, 48
      %v1214 = vpop.permute.xlu0 %1213
      %1215 = vrot.lane.b32.xlu0 %v788, 48
      %v1216 = vpop.permute.xlu0 %1215
      %v1220 = vsel %vm841, %v1208, 0
      %v1223 = vsel %vm841, %v1209, 0
      %v1226 = vsel %vm841, %v1210, 0
      %v1228 = vsel %vm893, %v1216, 0
      %1230 = vmatpush.msra.mxu0 0.0
      %1231 = vmatpush.msra.mxu0 0.0
      %1232 = vmatpush.msra.mxu0 0.0
      %1233 = vmatpush.msra.mxu0 0.0
      %1234 = vmatpush.msra.mxu0 0.0
      %1235 = vmatpush.msra.mxu0 0.0
      %1236 = vmatpush.msra.mxu0 0.0
      %1237 = vmatpush.msra.mxu0 0.0
      %1238 = vmatpush.msra.mxu0 0.0
      %1239 = vmatpush.msra.mxu0 0.0
      %1240 = vmatpush.msra.mxu0 0.0
      %1241 = vmatpush.msra.mxu0 0.0
      %1242 = vmatpush.msra.mxu0 0.0
      %1243 = vmatpush.msra.mxu0 %v1228
      %1244 = vmatpush.msra.mxu0 %v1214
      %1245 = vmatpush.msra.mxu0 %v1212
      %1246 = vmatmul.f32.gmra.mxu0 %v1220
      %v1247 = vpop.f32.mrf.mxu0
      %v1248 = vadd.f32 0.0, %v1247
      %1249 = vmatmul.f32.gmra.mxu0 %v1223
      %v1250 = vpop.f32.mrf.mxu0
      %v1251 = vadd.f32 0.0, %v1250
      %1252 = vmatmul.f32.gmra.mxu0 %v1226
      %v1253 = vpop.f32.mrf.mxu0
      %v1254 = vadd.f32 0.0, %v1253
      %1255 = vdwg.mxu0
      %v1256 = vld [vmem:[%s9 + $0x10] sm:$0xff]
      %v1258 = vsel %vm799, %v1248, 0
      %v1261 = vsel %vm799, %v1251, 0
      %v1264 = vsel %vm799, %v1254, 0
      %1266 = vmatpush.msra.mxu0 0.0
      %1267 = vmatpush.msra.mxu0 0.0
      %1268 = vmatpush.msra.mxu0 0.0
      %1269 = vmatpush.msra.mxu0 0.0
      %1270 = vmatpush.msra.mxu0 0.0
      %1271 = vmatpush.msra.mxu0 0.0
      %1272 = vmatpush.msra.mxu0 0.0
      %1273 = vmatpush.msra.mxu0 0.0
      %1274 = vmatpush.msra.mxu0 0.0
      %1275 = vmatpush.msra.mxu0 0.0
      %1276 = vmatpush.msra.mxu0 0.0
      %1277 = vmatpush.msra.mxu0 0.0
      %1278 = vmatpush.msra.mxu0 0.0
      %1279 = vmatpush.msra.mxu0 0.0
      %1280 = vmatpush.msra.mxu0 0.0
      %1281 = vmatpush.msra.mxu0 %v1256
      %1282 = vmatmul.f32.gmra.mxu0 %v1258
      %v1283 = vpop.f32.mrf.mxu0
      %v1284 = vadd.f32 0.0, %v1283
      %1285 = vmatmul.f32.gmra.mxu0 %v1261
      %v1286 = vpop.f32.mrf.mxu0
      %v1287 = vadd.f32 0.0, %v1286
      %1288 = vmatmul.f32.gmra.mxu0 %v1264
      %v1289 = vpop.f32.mrf.mxu0
      %v1290 = vadd.f32 0.0, %v1289
      %1291 = vdwg.mxu0
      %v1292 = vadd.f32 %v1117, %v1284
      %v1293 = vadd.f32 %v1120, %v1287
      %v1294 = vadd.f32 %v1123, %v1290
      %1295 = vrot.lane.b32.xlu0 %v782, 104
      %v1296 = vpop.permute.xlu0 %1295
      %1297 = vrot.lane.b32.xlu0 %v785, 104
      %v1298 = vpop.permute.xlu0 %1297
      %1299 = vrot.lane.b32.xlu0 %v788, 104
      %v1300 = vpop.permute.xlu0 %1299
      %1301 = vrot.lane.b32.xlu0 %v782, 72
      %v1302 = vpop.permute.xlu0 %1301
      %1303 = vrot.lane.b32.xlu0 %v785, 72
      %v1304 = vpop.permute.xlu0 %1303
      %1305 = vrot.lane.b32.xlu0 %v788, 72
      %v1306 = vpop.permute.xlu0 %1305
      %v1307 = vsel %vm799, %v1296, 0
      %v1309 = vsel %vm799, %v1298, 0
      %v1311 = vsel %vm799, %v1300, 0
      %v1313 = vsel %vm799, %v1302, 0
      %v1315 = vsel %vm799, %v1304, 0
      %v1317 = vsel %vm799, %v1306, 0
      %1319 = vmatpush.xpose.msra.mxu0 0.0
      %1320 = vmatpush.xpose.msra.mxu0 0.0
      %1321 = vmatpush.xpose.msra.mxu0 0.0
      %1322 = vmatpush.xpose.msra.mxu0 0.0
      %1323 = vmatpush.xpose.msra.mxu0 0.0
      %1324 = vmatpush.xpose.msra.mxu0 0.0
      %1325 = vmatpush.xpose.msra.mxu0 0.0
      %1326 = vmatpush.xpose.msra.mxu0 0.0
      %1327 = vmatpush.xpose.msra.mxu0 0.0
      %1328 = vmatpush.xpose.msra.mxu0 0.0
      %1329 = vmatpush.xpose.msra.mxu0 0.0
      %1330 = vmatpush.xpose.msra.mxu0 0.0
      %1331 = vmatpush.xpose.msra.mxu0 0.0
      %1332 = vmatpush.xpose.msra.mxu0 %v1317
      %1333 = vmatpush.xpose.msra.mxu0 %v1315
      %1334 = vmatpush.xpose.msra.mxu0 %v1313
      %1335 = vmatmul.f32.gmra.mxu0 %v1307
      %v1336 = vpop.f32.mrf.mxu0
      %v1337 = vadd.f32 0.0, %v1336
      %1338 = vmatmul.f32.gmra.mxu0 %v1309
      %v1339 = vpop.f32.mrf.mxu0
      %v1340 = vadd.f32 0.0, %v1339
      %1341 = vmatmul.f32.gmra.mxu0 %v1311
      %v1342 = vpop.f32.mrf.mxu0
      %v1343 = vadd.f32 0.0, %v1342
      %1344 = vdwg.mxu0
      %v1345 = vmul.f32 %v1337, 0.35355338
      %v1346 = vmul.f32 %v1340, 0.35355338
      %v1347 = vmul.f32 %v1343, 0.35355338
      %v1348 = vsel %vm841, %v1345, -inf
      %1349 = vmax.xlane.f32.xlu0 %v1348
      %v1350 = vpop.xlane.xlu0 %1349
      %v1351 = vsel %vm841, %v1346, -inf
      %1352 = vmax.xlane.f32.xlu0 %v1351
      %v1353 = vpop.xlane.xlu0 %1352
      %v1354 = vsel %vm848, %v1347, -inf
      %1355 = vmax.xlane.f32.xlu0 %v1354
      %v1356 = vpop.xlane.xlu0 %1355
      %v1357 = vsub.f32 %v1345, %v1350
      %v1358 = vsub.f32 %v1346, %v1353
      %v1359 = vsub.f32 %v1347, %v1356
      %v1360 = vmul.f32 %v1357, 1.442695
      %v1361 = vpow.pop %v1360
      %v1362 = vmul.f32 %v1358, 1.442695
      %v1363 = vpow.pop %v1362
      %v1364 = vmul.f32 %v1359, 1.442695
      %v1365 = vpow.pop %v1364
      %v1366 = vsel %vm841, %v1361, 0.0
      %1367 = vadd.xlane.f32.xlu0 %v1366
      %v1368 = vpop.xlane.xlu0 %1367
      %v1369 = vsel %vm841, %v1363, 0.0
      %1370 = vadd.xlane.f32.xlu0 %v1369
      %v1371 = vpop.xlane.xlu0 %1370
      %v1372 = vsel %vm848, %v1365, 0.0
      %1373 = vadd.xlane.f32.xlu0 %v1372
      %v1374 = vpop.xlane.xlu0 %1373
      %v1375 = vrcp.pop %v1368
      %v1376 = vrcp.pop %v1371
      %v1377 = vrcp.pop %v1374
      %v1378 = vmul.f32 %v1361, %v1375
      %v1379 = vmul.f32 %v1363, %v1376
      %v1380 = vmul.f32 %v1365, %v1377
      %1381 = vrot.lane.b32.xlu0 %v782, 40
      %v1382 = vpop.permute.xlu0 %1381
      %1383 = vrot.lane.b32.xlu0 %v785, 40
      %v1384 = vpop.permute.xlu0 %1383
      %1385 = vrot.lane.b32.xlu0 %v788, 40
      %v1386 = vpop.permute.xlu0 %1385
      %v1390 = vsel %vm841, %v1378, 0
      %v1393 = vsel %vm841, %v1379, 0
      %v1396 = vsel %vm841, %v1380, 0
      %v1398 = vsel %vm893, %v1386, 0
      %1400 = vmatpush.msra.mxu0 0.0
      %1401 = vmatpush.msra.mxu0 0.0
      %1402 = vmatpush.msra.mxu0 0.0
      %1403 = vmatpush.msra.mxu0 0.0
      %1404 = vmatpush.msra.mxu0 0.0
      %1405 = vmatpush.msra.mxu0 0.0
      %1406 = vmatpush.msra.mxu0 0.0
      %1407 = vmatpush.msra.mxu0 0.0
      %1408 = vmatpush.msra.mxu0 0.0
      %1409 = vmatpush.msra.mxu0 0.0
      %1410 = vmatpush.msra.mxu0 0.0
      %1411 = vmatpush.msra.mxu0 0.0
      %1412 = vmatpush.msra.mxu0 0.0
      %1413 = vmatpush.msra.mxu0 %v1398
      %1414 = vmatpush.msra.mxu0 %v1384
      %1415 = vmatpush.msra.mxu0 %v1382
      %1416 = vmatmul.f32.gmra.mxu0 %v1390
      %v1417 = vpop.f32.mrf.mxu0
      %v1418 = vadd.f32 0.0, %v1417
      %1419 = vmatmul.f32.gmra.mxu0 %v1393
      %v1420 = vpop.f32.mrf.mxu0
      %v1421 = vadd.f32 0.0, %v1420
      %1422 = vmatmul.f32.gmra.mxu0 %v1396
      %v1423 = vpop.f32.mrf.mxu0
      %v1424 = vadd.f32 0.0, %v1423
      %1425 = vdwg.mxu0
      %v1426 = vld [vmem:[%s9 + $0x18] sm:$0xff]
      %v1428 = vsel %vm799, %v1418, 0
      %v1431 = vsel %vm799, %v1421, 0
      %v1434 = vsel %vm799, %v1424, 0
      %1436 = vmatpush.msra.mxu0 0.0
      %1437 = vmatpush.msra.mxu0 0.0
      %1438 = vmatpush.msra.mxu0 0.0
      %1439 = vmatpush.msra.mxu0 0.0
      %1440 = vmatpush.msra.mxu0 0.0
      %1441 = vmatpush.msra.mxu0 0.0
      %1442 = vmatpush.msra.mxu0 0.0
      %1443 = vmatpush.msra.mxu0 0.0
      %1444 = vmatpush.msra.mxu0 0.0
      %1445 = vmatpush.msra.mxu0 0.0
      %1446 = vmatpush.msra.mxu0 0.0
      %1447 = vmatpush.msra.mxu0 0.0
      %1448 = vmatpush.msra.mxu0 0.0
      %1449 = vmatpush.msra.mxu0 0.0
      %1450 = vmatpush.msra.mxu0 0.0
      %1451 = vmatpush.msra.mxu0 %v1426
      %1452 = vmatmul.f32.gmra.mxu0 %v1428
      %v1453 = vpop.f32.mrf.mxu0
      %v1454 = vadd.f32 0.0, %v1453
      %1455 = vmatmul.f32.gmra.mxu0 %v1431
      %v1456 = vpop.f32.mrf.mxu0
      %v1457 = vadd.f32 0.0, %v1456
      %1458 = vmatmul.f32.gmra.mxu0 %v1434
      %v1459 = vpop.f32.mrf.mxu0
      %v1460 = vadd.f32 0.0, %v1459
      %1461 = vdwg.mxu0
      %v1462 = vadd.f32 %v1292, %v1454
      %v1463 = vadd.f32 %v1293, %v1457
      %v1464 = vadd.f32 %v1294, %v1460
      %v1465 = vadd.f32 %v657, %v1462
      %v1466 = vadd.f32 %v658, %v1463
      %v1467 = vadd.f32 %v659, %v1464
      %v1468 = vld [vmem:[%s10] sm:$0x1]
      %v1470 = vperm.slane %v1468, 0
      %v1472 = vadd.f32 %v1465, %v1470
      %v1473 = vadd.f32 %v1466, %v1470
      %v1474 = vadd.f32 %v1467, %v1470
      %v1475 = vld [vmem:[%s11] sm:$0x1]
      %v1476 = vld [vmem:[%s12] sm:$0x1]
      %v1477 = vsel %vm648, %v1472, 0.0
      %1478 = vadd.xlane.f32.xlu0 %v1477
      %v1479 = vpop.xlane.xlu0 %1478
      %v1480 = vsel %vm648, %v1473, 0.0
      %1481 = vadd.xlane.f32.xlu0 %v1480
      %v1482 = vpop.xlane.xlu0 %1481
      %v1483 = vsel %vm646, %v1474, 0.0
      %1484 = vadd.xlane.f32.xlu0 %v1483
      %v1485 = vpop.xlane.xlu0 %1484
      %v1486 = vmul.f32 %v1479, %v677
      %v1487 = vmul.f32 %v1482, %v677
      %v1488 = vmul.f32 %v1485, %v677
      %v1489 = vsub.f32 %v1472, %v1486
      %v1490 = vsub.f32 %v1473, %v1487
      %v1491 = vsub.f32 %v1474, %v1488
      %v1492 = vmul.f32 %v1489, %v1489
      %v1493 = vmul.f32 %v1490, %v1490
      %v1494 = vmul.f32 %v1491, %v1491
      %v1495 = vsel %vm648, %v1492, 0.0
      %1496 = vadd.xlane.f32.xlu0 %v1495
      %v1497 = vpop.xlane.xlu0 %1496
      %v1498 = vsel %vm648, %v1493, 0.0
      %1499 = vadd.xlane.f32.xlu0 %v1498
      %v1500 = vpop.xlane.xlu0 %1499
      %v1501 = vsel %vm646, %v1494, 0.0
      %1502 = vadd.xlane.f32.xlu0 %v1501
      %v1503 = vpop.xlane.xlu0 %1502
      %v1504 = vmul.f32 %v1497, %v677
      %v1505 = vmul.f32 %v1500, %v677
      %v1506 = vmul.f32 %v1503, %v677
      %v1507 = vadd.f32 %v1504, 1e-06
      %v1508 = vadd.f32 %v1505, 1e-06
      %v1509 = vadd.f32 %v1506, 1e-06
      %v1510 = vrsqrt.pop %v1507
      %v1511 = vmul.f32 %v1510, %v1507
      %v1512 = vmul.f32 %v1511, %v1510
      %v1513 = vmul.f32 0.5, %v1512
      %v1514 = vsub.f32 1.5, %v1513
      %v1515 = vmul.f32 %v1510, %v1514
      %vm1516 = vweird.f32 %v1507
      %vm1517 = vweird.f32 %v1510
      %vm1518 = vmor %vm1516, %vm1517
      %v1519 = vsel %vm1518, %v1510, %v1515
      %v1520 = vrsqrt.pop %v1508
      %v1521 = vmul.f32 %v1520, %v1508
      %v1522 = vmul.f32 %v1521, %v1520
      %v1523 = vmul.f32 0.5, %v1522
      %v1524 = vsub.f32 1.5, %v1523
      %v1525 = vmul.f32 %v1520, %v1524
      %vm1526 = vweird.f32 %v1508
      %vm1527 = vweird.f32 %v1520
      %vm1528 = vmor %vm1526, %vm1527
      %v1529 = vsel %vm1528, %v1520, %v1525
      %v1530 = vrsqrt.pop %v1509
      %v1531 = vmul.f32 %v1530, %v1509
      %v1532 = vmul.f32 %v1531, %v1530
      %v1533 = vmul.f32 0.5, %v1532
      %v1534 = vsub.f32 1.5, %v1533
      %v1535 = vmul.f32 %v1530, %v1534
      %vm1536 = vweird.f32 %v1509
      %vm1537 = vweird.f32 %v1530
      %vm1538 = vmor %vm1536, %vm1537
      %v1539 = vsel %vm1538, %v1530, %v1535
      %v1540 = vmul.f32 %v1489, %v1519
      %v1541 = vmul.f32 %v1490, %v1529
      %v1542 = vmul.f32 %v1491, %v1539
      %v1544 = vperm.slane %v1475, 0
      %v1546 = vmul.f32 %v1540, %v1544
      %v1547 = vmul.f32 %v1541, %v1544
      %v1548 = vmul.f32 %v1542, %v1544
      %v1550 = vperm.slane %v1476, 0
      %v1552 = vadd.f32 %v1546, %v1550
      %v1553 = vadd.f32 %v1547, %v1550
      %v1554 = vadd.f32 %v1548, %v1550
      %v1555 = vld [vmem:[%s13] sm:$0xff]
      %v1556 = vld [vmem:[%s13 + $0x8] sm:$0xff]
      %v1557 = vld [vmem:[%s13 + $0x10] sm:$0xff]
      %v1558 = vld [vmem:[%s13 + $0x18] sm:$0xff]
      %v1559 = vld [vmem:[%s14] sm:$0x1]
      %v1561 = vperm.slane %v1559, 0
      %v1564 = vsel %vm648, %v1552, 0
      %v1567 = vsel %vm648, %v1553, 0
      %v1570 = vsel %vm648, %v1554, 0
      %1572 = vmatpush.msra.mxu0 0.0
      %1573 = vmatpush.msra.mxu0 0.0
      %1574 = vmatpush.msra.mxu0 0.0
      %1575 = vmatpush.msra.mxu0 0.0
      %1576 = vmatpush.msra.mxu0 0.0
      %1577 = vmatpush.msra.mxu0 0.0
      %1578 = vmatpush.msra.mxu0 0.0
      %1579 = vmatpush.msra.mxu0 0.0
      %1580 = vmatpush.msra.mxu0 0.0
      %1581 = vmatpush.msra.mxu0 0.0
      %1582 = vmatpush.msra.mxu0 0.0
      %1583 = vmatpush.msra.mxu0 0.0
      %1584 = vmatpush.msra.mxu0 %v1558
      %1585 = vmatpush.msra.mxu0 %v1557
      %1586 = vmatpush.msra.mxu0 %v1556
      %1587 = vmatpush.msra.mxu0 %v1555
      %1588 = vmatmul.f32.gmra.mxu0 %v1564
      %v1589 = vpop.f32.mrf.mxu0
      %v1590 = vadd.f32 %v1561, %v1589
      %1591 = vmatmul.f32.gmra.mxu0 %v1567
      %v1592 = vpop.f32.mrf.mxu0
      %v1593 = vadd.f32 %v1561, %v1592
      %1594 = vmatmul.f32.gmra.mxu0 %v1570
      %v1595 = vpop.f32.mrf.mxu0
      %v1596 = vadd.f32 %v1561, %v1595
      %1597 = vdwg.mxu0
      %v1598 = vmul.f32 %v1590, 0.5
      %v1599 = vmul.f32 %v1593, 0.5
      %v1600 = vmul.f32 %v1596, 0.5
      %v1601 = vmul.f32 %v1590, 0.70710677
      %v1602 = vmul.f32 %v1593, 0.70710677
      %v1603 = vmul.f32 %v1596, 0.70710677
      %vm1604 = vcmp.ge.f32.partialorder %v1601, 0.0
      %vm1605 = vcmp.ge.f32.partialorder %v1602, 0.0
      %vm1606 = vcmp.ge.f32.partialorder %v1603, 0.0
      %v1607 = vsel %vm1604, 1.0, -1.0
      %v1608 = vsel %vm1605, 1.0, -1.0
      %v1609 = vsel %vm1606, 1.0, -1.0
      %v1610 = vand.u32 2147483647, %v1601
      %v1611 = vand.u32 2147483647, %v1602
      %v1612 = vand.u32 2147483647, %v1603
      %v1613 = vmul.f32 %v1610, 0.3275911
      %v1614 = vmul.f32 %v1611, 0.3275911
      %v1615 = vmul.f32 %v1612, 0.3275911
      %v1616 = vadd.f32 %v1613, 1.0
      %v1617 = vadd.f32 %v1614, 1.0
      %v1618 = vadd.f32 %v1615, 1.0
      %v1619 = vrcp.pop %v1616
      %v1620 = vmul.f32 %v1616, %v1619
      %v1621 = vsub.f32 1.0, %v1620
      %v1622 = vmul.f32 %v1619, %v1621
      %v1623 = vadd.f32 %v1619, %v1622
      %vm1624 = vweird.f32 %v1616
      %vm1625 = vweird.f32 %v1619
      %vm1626 = vmor %vm1624, %vm1625
      %v1627 = vsel %vm1626, %v1619, %v1623
      %v1628 = vand.u32 2147483647, %v1616
      %vm1629 = vcmp.eq.f32.partialorder %v1628, 8.507059e+37
      %v1630 = vand.u32 %v1616, 2147483648
      %v1631 = vor.u32 1.1754944e-38, %v1630
      %v1632 = vsel %vm1629, %v1631, %v1627
      %v1633 = vmul.f32 1.0, %v1632
      %v1634 = vrcp.pop %v1617
      %v1635 = vmul.f32 %v1617, %v1634
      %v1636 = vsub.f32 1.0, %v1635
      %v1637 = vmul.f32 %v1634, %v1636
      %v1638 = vadd.f32 %v1634, %v1637
      %vm1639 = vweird.f32 %v1617
      %vm1640 = vweird.f32 %v1634
      %vm1641 = vmor %vm1639, %vm1640
      %v1642 = vsel %vm1641, %v1634, %v1638
      %v1643 = vand.u32 2147483647, %v1617
      %vm1644 = vcmp.eq.f32.partialorder %v1643, 8.507059e+37
      %v1645 = vand.u32 %v1617, 2147483648
      %v1646 = vor.u32 1.1754944e-38, %v1645
      %v1647 = vsel %vm1644, %v1646, %v1642
      %v1648 = vmul.f32 1.0, %v1647
      %v1649 = vrcp.pop %v1618
      %v1650 = vmul.f32 %v1618, %v1649
      %v1651 = vsub.f32 1.0, %v1650
      %v1652 = vmul.f32 %v1649, %v1651
      %v1653 = vadd.f32 %v1649, %v1652
      %vm1654 = vweird.f32 %v1618
      %vm1655 = vweird.f32 %v1649
      %vm1656 = vmor %vm1654, %vm1655
      %v1657 = vsel %vm1656, %v1649, %v1653
      %v1658 = vand.u32 2147483647, %v1618
      %vm1659 = vcmp.eq.f32.partialorder %v1658, 8.507059e+37
      %v1660 = vand.u32 %v1618, 2147483648
      %v1661 = vor.u32 1.1754944e-38, %v1660
      %v1662 = vsel %vm1659, %v1661, %v1657
      %v1663 = vmul.f32 1.0, %v1662
      %v1664 = vmul.f32 %v1633, 1.0614054
      %v1665 = vmul.f32 %v1648, 1.0614054
      %v1666 = vmul.f32 %v1663, 1.0614054
      %v1667 = vadd.f32 %v1664, -1.4531521
      %v1668 = vadd.f32 %v1665, -1.4531521
      %v1669 = vadd.f32 %v1666, -1.4531521
      %v1670 = vmul.f32 %v1667, %v1633
      %v1671 = vmul.f32 %v1668, %v1648
      %v1672 = vmul.f32 %v1669, %v1663
      %v1673 = vadd.f32 %v1670, 1.4214138
      %v1674 = vadd.f32 %v1671, 1.4214138
      %v1675 = vadd.f32 %v1672, 1.4214138
      %v1676 = vmul.f32 %v1673, %v1633
      %v1677 = vmul.f32 %v1674, %v1648
      %v1678 = vmul.f32 %v1675, %v1663
      %v1679 = vadd.f32 %v1676, -0.28449672
      %v1680 = vadd.f32 %v1677, -0.28449672
      %v1681 = vadd.f32 %v1678, -0.28449672
      %v1682 = vmul.f32 %v1679, %v1633
      %v1683 = vmul.f32 %v1680, %v1648
      %v1684 = vmul.f32 %v1681, %v1663
      %v1685 = vadd.f32 %v1682, 0.2548296
      %v1686 = vadd.f32 %v1683, 0.2548296
      %v1687 = vadd.f32 %v1684, 0.2548296
      %v1688 = vmul.f32 %v1685, %v1633
      %v1689 = vmul.f32 %v1686, %v1648
      %v1690 = vmul.f32 %v1687, %v1663
      %v1691 = vsub.f32 0.0, %v1610
      %v1692 = vsub.f32 0.0, %v1611
      %v1693 = vsub.f32 0.0, %v1612
      %v1694 = vmul.f32 %v1691, %v1610
      %v1695 = vmul.f32 %v1692, %v1611
      %v1696 = vmul.f32 %v1693, %v1612
      %v1697 = vmul.f32 %v1694, 1.442695
      %v1698 = vpow.pop %v1697
      %v1699 = vmul.f32 %v1695, 1.442695
      %v1700 = vpow.pop %v1699
      %v1701 = vmul.f32 %v1696, 1.442695
      %v1702 = vpow.pop %v1701
      %v1703 = vmul.f32 %v1688, %v1698
      %v1704 = vmul.f32 %v1689, %v1700
      %v1705 = vmul.f32 %v1690, %v1702
      %v1706 = vsub.f32 1.0, %v1703
      %v1707 = vsub.f32 1.0, %v1704
      %v1708 = vsub.f32 1.0, %v1705
      %v1709 = vmul.f32 %v1607, %v1706
      %v1710 = vmul.f32 %v1608, %v1707
      %v1711 = vmul.f32 %v1609, %v1708
      %v1712 = vadd.f32 %v1709, 1.0
      %v1713 = vadd.f32 %v1710, 1.0
      %v1714 = vadd.f32 %v1711, 1.0
      %v1715 = vmul.f32 %v1598, %v1712
      %v1716 = vmul.f32 %v1599, %v1713
      %v1717 = vmul.f32 %v1600, %v1714
      %v1718 = vld [vmem:[%s15] sm:$0xff]
      %v1719 = vld [vmem:[%s15 + $0x8] sm:$0xff]
      %v1720 = vld [vmem:[%s15 + $0x10] sm:$0xff]
      %v1721 = vld [vmem:[%s15 + $0x18] sm:$0xff]
      %v1722 = vld [vmem:[%s15 + $0x20] sm:$0xff]
      %v1723 = vld [vmem:[%s15 + $0x28] sm:$0xff]
      %v1724 = vld [vmem:[%s15 + $0x30] sm:$0xff]
      %v1725 = vld [vmem:[%s15 + $0x38] sm:$0xff]
      %v1726 = vld [vmem:[%s15 + $0x40] sm:$0xff]
      %v1727 = vld [vmem:[%s15 + $0x48] sm:$0xff]
      %v1728 = vld [vmem:[%s15 + $0x50] sm:$0xff]
      %v1729 = vld [vmem:[%s15 + $0x58] sm:$0xff]
      %v1730 = vld [vmem:[%s15 + $0x60] sm:$0xff]
      %v1731 = vld [vmem:[%s15 + $0x68] sm:$0xff]
      %v1732 = vld [vmem:[%s15 + $0x70] sm:$0xff]
      %v1733 = vld [vmem:[%s15 + $0x78] sm:$0xff]
      %1734 = vmatpush.msra.mxu0 %v1733
      %1735 = vmatpush.msra.mxu0 %v1732
      %1736 = vmatpush.msra.mxu0 %v1731
      %1737 = vmatpush.msra.mxu0 %v1730
      %1738 = vmatpush.msra.mxu0 %v1729
      %1739 = vmatpush.msra.mxu0 %v1728
      %1740 = vmatpush.msra.mxu0 %v1727
      %1741 = vmatpush.msra.mxu0 %v1726
      %1742 = vmatpush.msra.mxu0 %v1725
      %1743 = vmatpush.msra.mxu0 %v1724
      %1744 = vmatpush.msra.mxu0 %v1723
      %1745 = vmatpush.msra.mxu0 %v1722
      %1746 = vmatpush.msra.mxu0 %v1721
      %1747 = vmatpush.msra.mxu0 %v1720
      %1748 = vmatpush.msra.mxu0 %v1719
      %1749 = vmatpush.msra.mxu0 %v1718
      %1750 = vmatmul.f32.gmra.mxu0 %v1715
      %v1751 = vpop.f32.mrf.mxu0
      %v1752 = vadd.f32 0.0, %v1751
      %1753 = vmatmul.f32.gmra.mxu0 %v1716
      %v1754 = vpop.f32.mrf.mxu0
      %v1755 = vadd.f32 0.0, %v1754
      %1756 = vmatmul.f32.gmra.mxu0 %v1717
      %v1757 = vpop.f32.mrf.mxu0
      %v1758 = vadd.f32 0.0, %v1757
      %1759 = vdwg.mxu0
      %v1760 = vadd.f32 %v1472, %v1752
      %v1761 = vadd.f32 %v1473, %v1755
      %v1762 = vadd.f32 %v1474, %v1758
      %v1763 = vld [vmem:[%s16] sm:$0x1]
      %v1765 = vperm.slane %v1763, 0
      %v1767 = vadd.f32 %v1760, %v1765
      %v1768 = vadd.f32 %v1761, %v1765
      %v1769 = vadd.f32 %v1762, %v1765
      %v1770 = vld [vmem:[%s17] sm:$0x1]
      %v1771 = vld [vmem:[%s18] sm:$0x1]
      %v1772 = vsel %vm648, %v1767, 0.0
      %1773 = vadd.xlane.f32.xlu0 %v1772
      %v1774 = vpop.xlane.xlu0 %1773
      %v1775 = vsel %vm648, %v1768, 0.0
      %1776 = vadd.xlane.f32.xlu0 %v1775
      %v1777 = vpop.xlane.xlu0 %1776
      %v1778 = vsel %vm646, %v1769, 0.0
      %1779 = vadd.xlane.f32.xlu0 %v1778
      %v1780 = vpop.xlane.xlu0 %1779
      %v1781 = vmul.f32 %v1774, %v677
      %v1782 = vmul.f32 %v1777, %v677
      %v1783 = vmul.f32 %v1780, %v677
      %v1784 = vsub.f32 %v1767, %v1781
      %v1785 = vsub.f32 %v1768, %v1782
      %v1786 = vsub.f32 %v1769, %v1783
      %v1787 = vmul.f32 %v1784, %v1784
      %v1788 = vmul.f32 %v1785, %v1785
      %v1789 = vmul.f32 %v1786, %v1786
      %v1790 = vsel %vm648, %v1787, 0.0
      %1791 = vadd.xlane.f32.xlu0 %v1790
      %v1792 = vpop.xlane.xlu0 %1791
      %v1793 = vsel %vm648, %v1788, 0.0
      %1794 = vadd.xlane.f32.xlu0 %v1793
      %v1795 = vpop.xlane.xlu0 %1794
      %v1796 = vsel %vm646, %v1789, 0.0
      %1797 = vadd.xlane.f32.xlu0 %v1796
      %v1798 = vpop.xlane.xlu0 %1797
      %v1799 = vmul.f32 %v1792, %v677
      %v1800 = vmul.f32 %v1795, %v677
      %v1801 = vmul.f32 %v1798, %v677
      %v1802 = vadd.f32 %v1799, 1e-06
      %v1803 = vadd.f32 %v1800, 1e-06
      %v1804 = vadd.f32 %v1801, 1e-06
      %v1805 = vrsqrt.pop %v1802
      %v1806 = vmul.f32 %v1805, %v1802
      %v1807 = vmul.f32 %v1806, %v1805
      %v1808 = vmul.f32 0.5, %v1807
      %v1809 = vsub.f32 1.5, %v1808
      %v1810 = vmul.f32 %v1805, %v1809
      %vm1811 = vweird.f32 %v1802
      %vm1812 = vweird.f32 %v1805
      %vm1813 = vmor %vm1811, %vm1812
      %v1814 = vsel %vm1813, %v1805, %v1810
      %v1815 = vrsqrt.pop %v1803
      %v1816 = vmul.f32 %v1815, %v1803
      %v1817 = vmul.f32 %v1816, %v1815
      %v1818 = vmul.f32 0.5, %v1817
      %v1819 = vsub.f32 1.5, %v1818
      %v1820 = vmul.f32 %v1815, %v1819
      %vm1821 = vweird.f32 %v1803
      %vm1822 = vweird.f32 %v1815
      %vm1823 = vmor %vm1821, %vm1822
      %v1824 = vsel %vm1823, %v1815, %v1820
      %v1825 = vrsqrt.pop %v1804
      %v1826 = vmul.f32 %v1825, %v1804
      %v1827 = vmul.f32 %v1826, %v1825
      %v1828 = vmul.f32 0.5, %v1827
      %v1829 = vsub.f32 1.5, %v1828
      %v1830 = vmul.f32 %v1825, %v1829
      %vm1831 = vweird.f32 %v1804
      %vm1832 = vweird.f32 %v1825
      %vm1833 = vmor %vm1831, %vm1832
      %v1834 = vsel %vm1833, %v1825, %v1830
      %v1835 = vmul.f32 %v1784, %v1814
      %v1836 = vmul.f32 %v1785, %v1824
      %v1837 = vmul.f32 %v1786, %v1834
      %v1839 = vperm.slane %v1770, 0
      %v1841 = vmul.f32 %v1835, %v1839
      %v1842 = vmul.f32 %v1836, %v1839
      %v1843 = vmul.f32 %v1837, %v1839
      %v1845 = vperm.slane %v1771, 0
      %v1847 = vadd.f32 %v1841, %v1845
      %v1848 = vadd.f32 %v1842, %v1845
      %v1849 = vadd.f32 %v1843, %v1845
      %1850 = vst.msk [vmem:[%s602] sm:$0xff] %vm648, %v1847
      %1851 = vst.msk [vmem:[%s602 + $0x8] sm:$0xff] %vm648, %v1848
      %1852 = vst.msk [vmem:[%s602 + $0x10] sm:$0x1] %vm646, %v1849
      %p1853 = scmp.lt.s32.totalorder %s30, 1
      %s1854 = scalar_select %p1853, %s30, 1
      %s1855 = smul.addr %s1854, 3
      %s1856 = smul.addr %s1855, 8
      %s1857 = scalar_lea.vmem %s19, %s1856
      // Predicated region
      $region97: #{_forward_jit.3} parent=95 // pred_check
        %p1858 = pneg %p452
      $region98: #{_forward_jit.3} parent=95 // pred_check_branch
        %1860 = sbr.rel (%p1858) target = $region100
      $region99: #{_forward_jit.3} parent=95 // pred_region
        _
      $region100: #{_forward_jit.3} parent=95 // pred_fallthru
        _
    $region96: #{_forward_jit.3} parent=5 // pred_fallthru
      _
    %p1861 = scmp.le.s32.totalorder 2, %s25
    // Predicated region
    $region101: #{_forward_jit.3} parent=5 // pred_check
      %p1862 = pneg %p1861
    $region102: #{_forward_jit.3} parent=5 // pred_check_branch
      %1864 = sbr.rel (%p1862) target = $region104
    $region103: #{_forward_jit.3} parent=5 // pred_region
      %s1865 = ssub.s32 %s25, 2
      // Predicated region
      $region105: #{_forward_jit.3} parent=103 // pred_check
        %p1866 = pneg %p458
      $region106: #{_forward_jit.3} parent=103 // pred_check_branch
        %1868 = sbr.rel (%p1866) target = $region108
      $region107: #{_forward_jit.3} parent=103 // pred_region
        %p1869 = scmp.lt.s32.totalorder %s31, 1
        %s1870 = scalar_select %p1869, %s31, 1
        %s1871 = smul.addr %s1870, 3
        %s1872 = smul.addr %s1871, 8
        %s1873 = scalar_lea.vmem %s19, %s1872
      $region108: #{_forward_jit.3} parent=103 // pred_fallthru
        _
    $region104: #{_forward_jit.3} parent=5 // pred_fallthru
      _
  $region6: #{_forward_jit.3} parent=0 // loop_footer
    %s29 = sadd.s32 1, %s25
  $region7: #{_forward_jit.3} parent=0 // loop_footer_branch
    %24 = sbr.rel target = $region3
  $region8: #{_forward_jit.3} parent=0 // loop_exit
    _

</llo_original>
